<compile_context>
chip_gen: v5e
topology: v5e:2x2
jax: 0.10.0
libtpu: 0.0.40
codegen_flags: <defaults>
</compile_context>

<pallas_src>
import functools

import jax
import jax.numpy as jnp
from jax.experimental import pallas as pl
from jax.experimental.pallas import tpu as pltpu


# (dh, dw) taps of a 3x3, padding=1 convolution; index ti == kh*3 + kw.
_TAPS = tuple((dh, dw) for dh in (-1, 0, 1) for dw in (-1, 0, 1))


# -----------------------------------------------------------------------------
# Fused Pallas kernel (one grid step == one batch element)
# -----------------------------------------------------------------------------
def _dsc_fused_kernel(xg_ref, yl_ref, ut_ref, w1_ref, w2_ref, w3_ref, ep_ref,
                      o_ref, ypad_ref, cpad_ref, *, H, W, Cin, C4, pad):
    P = H * W
    Cin2 = 2 * Cin
    f32 = jnp.float32

    # Packed epilogue params: column 0 = folded BN shift (bias), column 1 = PReLU alpha.
    b1, a1 = ep_ref[0:Cin, 0:1], ep_ref[0:Cin, 1:2]
    b2, a2 = ep_ref[Cin:Cin2, 0:1], ep_ref[Cin:Cin2, 1:2]
    b3, a3 = ep_ref[Cin2:Cin2 + C4, 0:1], ep_ref[Cin2:Cin2 + C4, 1:2]

    # ---- conv1: 1x1 conv + BN + PReLU on x_gui (pixels in lanes) -------------
    xg = xg_ref[0]                                                  # [Cin, P]
    y1 = jnp.dot(w1_ref[...], xg, preferred_element_type=f32) + b1
    xg_act = jnp.where(y1 > 0, y1, a1 * y1)                         # [Cin, P]

    # ---- bilinear upsample (align_corners=True) as one matmul ----------------
    yu = jnp.dot(yl_ref[0], ut_ref[...], preferred_element_type=f32)  # [Cin, P]

    # ---- lane masks for the horizontal 3x3 taps -------------------------------
    col = jax.lax.broadcasted_iota(jnp.int32, (1, P), 1) % W
    m_left = col != 0                # valid output columns for dw == -1
    m_right = col != (W - 1)         # valid output columns for dw == +1

    def tap(padded_ref, dh, dw):
        off = pad + dh * W + dw      # static Python int
        v = padded_ref[:, off:off + P]
        if dw == -1:
            v = jnp.where(m_left, v, 0.0)
        elif dw == 1:
            v = jnp.where(m_right, v, 0.0)
        return v

    # ---- conv2: 3x3 conv + BN + PReLU on the upsampled y_high -----------------
    ypad_ref[...] = jnp.zeros_like(ypad_ref)
    ypad_ref[:, pad:pad + P] = yu
    acc2 = jnp.zeros((Cin, P), f32)
    for ti, (dh, dw) in enumerate(_TAPS):
        wt = w2_ref[:, ti * Cin:(ti + 1) * Cin]                     # [Cin, Cin]
        acc2 = acc2 + jnp.dot(wt, tap(ypad_ref, dh, dw),
                              preferred_element_type=f32)
    acc2 = acc2 + b2
    yh_act = jnp.where(acc2 > 0, acc2, a2 * acc2)                   # [Cin, P]

    # ---- torch.cat([conv2(y), conv1(x)], dim=1), built directly in scratch ----
    cpad_ref[...] = jnp.zeros_like(cpad_ref)
    cpad_ref[0:Cin, pad:pad + P] = yh_act
    cpad_ref[Cin:Cin2, pad:pad + P] = xg_act

    # ---- conv3: 3x3 conv (2*Cin -> 4*Cout) + BN + PReLU ------------------------
    acc3 = jnp.zeros((C4, P), f32)
    for ti, (dh, dw) in enumerate(_TAPS):
        wt = w3_ref[:, ti * Cin2:(ti + 1) * Cin2]                   # [C4, 2*Cin]
        acc3 = acc3 + jnp.dot(wt, tap(cpad_ref, dh, dw),
                              preferred_element_type=f32)
    acc3 = acc3 + b3
    o_ref[0] = jnp.where(acc3 > 0, acc3, a3 * acc3)                 # [C4, P] lane-dense


# -----------------------------------------------------------------------------
# Wrapper (NCHW in / NCHW out, PyTorch convention)
# -----------------------------------------------------------------------------
def _interp_matrix(out_size, in_size):
    """Rows of the 1-D bilinear (align_corners=True) interpolation operator."""
    if in_size == 1:
        return jnp.ones((out_size, 1), jnp.float32)
    if out_size == 1:
        return jnp.zeros((1, in_size), jnp.float32).at[0, 0].set(1.0)
    src = jnp.arange(out_size, dtype=jnp.float32) * ((in_size - 1) / (out_size - 1))
    i0 = jnp.clip(jnp.floor(src), 0, in_size - 1).astype(jnp.int32)
    i1 = jnp.clip(i0 + 1, 0, in_size - 1)
    frac = src - i0.astype(jnp.float32)
    rows = jnp.arange(out_size)
    m = jnp.zeros((out_size, in_size), jnp.float32)
    m = m.at[rows, i0].add(1.0 - frac)
    m = m.at[rows, i1].add(frac)
    return m


def dsc_module_forward(x_gui, y_high, prep):
    """Fused DSCModule forward. Inputs/outputs NCHW."""
    N, Cin, H, W = x_gui.shape
    _, _, Hl, Wl = y_high.shape
    C4 = prep['w3'].shape[0]
    Cout = C4 // 4
    P = H * W
    pad = W + 8                      # >= W+1 so every vertical tap read stays in-bounds

    # Dense upsample operator: Ut[a*Wl+b, h*W+w] = Mh[h,a] * Mw[w,b]  (compile-time const).
    mh = _interp_matrix(H, Hl)
    mw = _interp_matrix(W, Wl)
    ut = jnp.einsum('ha,wb->abhw', mh, mw).reshape(Hl * Wl, P)

    xg = x_gui.reshape(N, Cin, P).astype(jnp.float32)       # free, contiguity-preserving
    yl = y_high.reshape(N, Cin, Hl * Wl).astype(jnp.float32)

    kernel = functools.partial(_dsc_fused_kernel, H=H, W=W, Cin=Cin, C4=C4, pad=pad)
    out = pl.pallas_call(
        kernel,
        out_shape=jax.ShapeDtypeStruct((N, C4, P), jnp.float32),
        grid=(N,),
        in_specs=[
            pl.BlockSpec((1, Cin, P), lambda n: (n, 0, 0)),          # x_gui rows
            pl.BlockSpec((1, Cin, Hl * Wl), lambda n: (n, 0, 0)),    # y_high rows (low-res)
            pl.BlockSpec((Hl * Wl, P), lambda n: (0, 0)),            # upsample operator
            pl.BlockSpec((Cin, Cin), lambda n: (0, 0)),              # w1 (BN-folded)
            pl.BlockSpec((Cin, 9 * Cin), lambda n: (0, 0)),          # w2 taps (BN-folded)
            pl.BlockSpec((C4, 9 * 2 * Cin), lambda n: (0, 0)),       # w3 taps (BN-folded)
            pl.BlockSpec((2 * Cin + C4, 2), lambda n: (0, 0)),       # packed bias/alpha
        ],
        out_specs=pl.BlockSpec((1, C4, P), lambda n: (n, 0, 0)),
        scratch_shapes=[
            pltpu.VMEM((Cin, P + 2 * pad), jnp.float32),             # conv2 padded rows
            pltpu.VMEM((2 * Cin, P + 2 * pad), jnp.float32),         # conv3 padded rows
        ],
        compiler_params=pltpu.CompilerParams(dimension_semantics=("parallel",)),
    )(xg, yl, ut, prep['w1'], prep['w2'], prep['w3'], prep['ep'])

    # PixelShuffle(2) + NCHW arrangement: one cheap layout transpose outside the kernel.
    out = out.reshape(N, Cout, 2, 2, H, W).transpose(0, 1, 4, 2, 5, 3)
    return out.reshape(N, Cout, 2 * H, 2 * W)


# -----------------------------------------------------------------------------
# Parameters: synthetic raw params in PyTorch layout + kernel-ready repacking
# -----------------------------------------------------------------------------
def make_params(in_channels, out_channels, key):
    """Deterministic synthetic parameters, PyTorch layout (conv weight = [Cout, Cin, kh, kw])."""
    C, C2, C4 = in_channels, 2 * in_channels, 4 * out_channels
    k1, k2, k3 = jax.random.split(key, 3)

    def bn_prelu(c):
        r = jnp.arange(c, dtype=jnp.float32)
        return dict(gamma=1.0 + 0.01 * r, beta=0.02 * r, mean=0.01 * r,
                    var=1.0 + 0.05 * r, alpha=0.25 + 0.01 * r)

    return dict(
        conv1_w=0.1 * jax.random.normal(k1, (C, C, 1, 1), jnp.float32), bn1=bn_prelu(C),
        conv2_w=0.1 * jax.random.normal(k2, (C, C, 3, 3), jnp.float32), bn2=bn_prelu(C),
        conv3_w=0.1 * jax.random.normal(k3, (C4, C2, 3, 3), jnp.float32), bn3=bn_prelu(C4),
    )


def _fold_bn(bn, eps=1e-5):
    scale = bn['gamma'] * jax.lax.rsqrt(bn['var'] + eps)
    shift = bn['beta'] - bn['mean'] * scale
    return scale, shift


def prepare_params(raw, eps=1e-5):
    """Fold BN scale into the conv weights and repack into the kernel layouts."""
    s1, b1 = _fold_bn(raw['bn1'], eps)
    s2, b2 = _fold_bn(raw['bn2'], eps)
    s3, b3 = _fold_bn(raw['bn3'], eps)

    def col_weights(w, scale):
        # [Cout, Cin, 3, 3] -> [Cout, 9*Cin]; column index = (kh*3 + kw)*Cin + ci
        ws = w * scale[:, None, None, None]
        cout, cin = w.shape[0], w.shape[1]
        return jnp.transpose(ws, (0, 2, 3, 1)).reshape(cout, 9 * cin)

    ep = jnp.concatenate([
        jnp.stack([b1, raw['bn1']['alpha']], axis=1),
        jnp.stack([b2, raw['bn2']['alpha']], axis=1),
        jnp.stack([b3, raw['bn3']['alpha']], axis=1),
    ], axis=0)
    return dict(
        w1=raw['conv1_w'][:, :, 0, 0] * s1[:, None],
        w2=col_weights(raw['conv2_w'], s2),
        w3=col_weights(raw['conv3_w'], s3),
        ep=ep,
    )


# -----------------------------------------------------------------------------
# Plain-JAX reference (independent implementation for validation)
# -----------------------------------------------------------------------------
def _upsample_bilinear_ref(y, out_h, out_w):
    N, C, H, W = y.shape

    def coords(out_size, in_size):
        if in_size == 1 or out_size == 1:
            z = jnp.zeros((out_size,), jnp.int32)
            return z, z, jnp.zeros((out_size,), jnp.float32)
        src = jnp.arange(out_size, dtype=jnp.float32) * ((in_size - 1) / (out_size - 1))
        i0 = jnp.clip(jnp.floor(src), 0, in_size - 1).astype(jnp.int32)
        i1 = jnp.clip(i0 + 1, 0, in_size - 1)
        return i0, i1, src - i0.astype(jnp.float32)

    h0, h1, fh = coords(out_h, H)
    w0, w1, fw = coords(out_w, W)
    rows = ((1.0 - fh)[None, None, :, None] * jnp.take(y, h0, axis=2)
            + fh[None, None, :, None] * jnp.take(y, h1, axis=2))
    return ((1.0 - fw)[None, None, None, :] * jnp.take(rows, w0, axis=3)
            + fw[None, None, None, :] * jnp.take(rows, w1, axis=3))


def _conv_bn_prelu_ref(x, w, bn, padding, eps=1e-5):
    y = jax.lax.conv_general_dilated(
        x, w, window_strides=(1, 1), padding=padding,
        dimension_numbers=("NCHW", "OIHW", "NCHW"),
        precision=jax.lax.Precision.HIGHEST)
    scale, shift = _fold_bn(bn, eps)
    y = y * scale[None, :, None, None] + shift[None, :, None, None]
    alpha = bn['alpha'][None, :, None, None]
    return jnp.where(y > 0, y, alpha * y)


def dsc_reference(x_gui, y_high, raw):
    N, C, H, W = x_gui.shape
    yu = _upsample_bilinear_ref(y_high.astype(jnp.float32), H, W)
    xg = _conv_bn_prelu_ref(x_gui.astype(jnp.float32), raw['conv1_w'], raw['bn1'],
                            [(0, 0), (0, 0)])
    yh = _conv_bn_prelu_ref(yu, raw['conv2_w'], raw['bn2'], [(1, 1), (1, 1)])
    cat = jnp.concatenate([yh, xg], axis=1)
    c3 = _conv_bn_prelu_ref(cat, raw['conv3_w'], raw['bn3'], [(1, 1), (1, 1)])
    cout = c3.shape[1] // 4
    out = c3.reshape(N, cout, 2, 2, H, W).transpose(0, 1, 4, 2, 5, 3)
    return out.reshape(N, cout, 2 * H, 2 * W)


# -----------------------------------------------------------------------------
if __name__ == "__main__":
    in_channels, out_channels = 4, 4
    N, H, W = 2, 16, 16
    Hl, Wl = 8, 8                    # low-resolution y_high

    key = jax.random.PRNGKey(0)
    kx, ky, kp = jax.random.split(key, 3)
    x_gui = jax.random.normal(kx, (N, in_channels, H, W), jnp.float32)
    y_high = jax.random.normal(ky, (N, in_channels, Hl, Wl), jnp.float32)

    raw = make_params(in_channels, out_channels, kp)
    prep = prepare_params(raw)

    fwd = jax.jit(dsc_module_forward)
    out = jax.block_until_ready(fwd(x_gui, y_high, prep))
    assert out.shape == (N, out_channels, 2 * H, 2 * W), out.shape
    assert bool(jnp.all(jnp.isfinite(out)))

    ref = jax.block_until_ready(dsc_reference(x_gui, y_high, raw))
    max_err = float(jnp.max(jnp.abs(out - ref)))
    assert max_err < 2e-3, f"mismatch vs reference: {max_err}"
    print("KERNEL_OK")
</pallas_src>

<mosaic_0001>
module attributes {stable_mosaic.version = 11 : i64} {
  func.func @_dsc_fused_kernel(%arg0: i32, %arg1: memref<1x4x256xf32, #tpu.memory_space<vmem>>, %arg2: memref<1x4x64xf32, #tpu.memory_space<vmem>>, %arg3: memref<64x256xf32, #tpu.memory_space<vmem>>, %arg4: memref<4x4xf32, #tpu.memory_space<vmem>>, %arg5: memref<4x36xf32, #tpu.memory_space<vmem>>, %arg6: memref<16x72xf32, #tpu.memory_space<vmem>>, %arg7: memref<24x2xf32, #tpu.memory_space<vmem>>, %arg8: memref<1x16x256xf32, #tpu.memory_space<vmem>>, %arg9: memref<4x304xf32, #tpu.memory_space<vmem>>, %arg10: memref<8x304xf32, #tpu.memory_space<vmem>>) attributes {dimension_semantics = [#tpu.dimension_semantics<parallel>], iteration_bounds = array<i64: 2>, scalar_prefetch = 0 : i64, scratch_operands = 2 : i64, tpu.core_type = #tpu.core_type<tc>, window_params = [{transform_indices = @transform_0, window_bounds = array<i64: 1, 4, 256>}, {transform_indices = @transform_1, window_bounds = array<i64: 1, 4, 64>}, {pipeline_mode = #tpu.pipeline_mode<synchronous>, transform_indices = @transform_2, window_bounds = array<i64: 64, 256>}, {pipeline_mode = #tpu.pipeline_mode<synchronous>, transform_indices = @transform_3, window_bounds = array<i64: 4, 4>}, {pipeline_mode = #tpu.pipeline_mode<synchronous>, transform_indices = @transform_4, window_bounds = array<i64: 4, 36>}, {pipeline_mode = #tpu.pipeline_mode<synchronous>, transform_indices = @transform_5, window_bounds = array<i64: 16, 72>}, {pipeline_mode = #tpu.pipeline_mode<synchronous>, transform_indices = @transform_6, window_bounds = array<i64: 24, 2>}, {transform_indices = @transform_7, window_bounds = array<i64: 1, 16, 256>}]} {
    %c0 = arith.constant 0 : index
    %c0_0 = arith.constant 0 : index
    %0 = vector.load %arg7[%c0, %c0_0] : memref<24x2xf32, #tpu.memory_space<vmem>>, vector<4x1xf32>
    %c0_1 = arith.constant 0 : index
    %c1 = arith.constant 1 : index
    %1 = vector.load %arg7[%c0_1, %c1] : memref<24x2xf32, #tpu.memory_space<vmem>>, vector<4x1xf32>
    %c4 = arith.constant 4 : index
    %c0_2 = arith.constant 0 : index
    %2 = vector.load %arg7[%c4, %c0_2] : memref<24x2xf32, #tpu.memory_space<vmem>>, vector<4x1xf32>
    %c4_3 = arith.constant 4 : index
    %c1_4 = arith.constant 1 : index
    %3 = vector.load %arg7[%c4_3, %c1_4] : memref<24x2xf32, #tpu.memory_space<vmem>>, vector<4x1xf32>
    %c8 = arith.constant 8 : index
    %c0_5 = arith.constant 0 : index
    %4 = vector.load %arg7[%c8, %c0_5] : memref<24x2xf32, #tpu.memory_space<vmem>>, vector<16x1xf32>
    %c8_6 = arith.constant 8 : index
    %c1_7 = arith.constant 1 : index
    %5 = vector.load %arg7[%c8_6, %c1_7] : memref<24x2xf32, #tpu.memory_space<vmem>>, vector<16x1xf32>
    %c0_8 = arith.constant 0 : index
    %c0_9 = arith.constant 0 : index
    %c0_10 = arith.constant 0 : index
    %6 = vector.load %arg1[%c0_8, %c0_9, %c0_10] : memref<1x4x256xf32, #tpu.memory_space<vmem>>, vector<1x4x256xf32>
    %7 = vector.shape_cast %6 : vector<1x4x256xf32> to vector<4x256xf32>
    %c0_11 = arith.constant 0 : index
    %c0_12 = arith.constant 0 : index
    %8 = vector.load %arg4[%c0_11, %c0_12] : memref<4x4xf32, #tpu.memory_space<vmem>>, vector<4x4xf32>
    %cst = arith.constant dense<0.000000e+00> : vector<4x256xf32>
    %9 = tpu.matmul %8, %7, %cst {dimension_numbers = #tpu.dot_dimension_numbers<[1], [0], [0], [1], [0, 0, 1, 1], [], []>} : vector<4x4xf32>, vector<4x256xf32>, vector<4x256xf32> -> vector<4x256xf32>
    %10 = vector.broadcast %0 : vector<4x1xf32> to vector<4x256xf32>
    %11 = arith.addf %9, %10 : vector<4x256xf32>
    %cst_13 = arith.constant 0.000000e+00 : f32
    %12 = vector.broadcast %cst_13 : f32 to vector<4x256xf32>
    %13 = arith.cmpf ogt, %11, %12 : vector<4x256xf32>
    %14 = vector.broadcast %1 : vector<4x1xf32> to vector<4x256xf32>
    %15 = arith.mulf %14, %11 : vector<4x256xf32>
    %16 = arith.select %13, %11, %15 : vector<4x256xi1>, vector<4x256xf32>
    %c0_14 = arith.constant 0 : index
    %c0_15 = arith.constant 0 : index
    %c0_16 = arith.constant 0 : index
    %17 = vector.load %arg2[%c0_14, %c0_15, %c0_16] : memref<1x4x64xf32, #tpu.memory_space<vmem>>, vector<1x4x64xf32>
    %18 = vector.shape_cast %17 : vector<1x4x64xf32> to vector<4x64xf32>
    %c0_17 = arith.constant 0 : index
    %c0_18 = arith.constant 0 : index
    %19 = vector.load %arg3[%c0_17, %c0_18] : memref<64x256xf32, #tpu.memory_space<vmem>>, vector<64x256xf32>
    %cst_19 = arith.constant dense<0.000000e+00> : vector<4x256xf32>
    %20 = tpu.matmul %18, %19, %cst_19 {dimension_numbers = #tpu.dot_dimension_numbers<[1], [0], [0], [1], [0, 0, 1, 1], [], []>} : vector<4x64xf32>, vector<64x256xf32>, vector<4x256xf32> -> vector<4x256xf32>
    %21 = tpu.iota {dimensions = array<i32: 1>} : vector<1x256xi32>
    %c16_i32 = arith.constant 16 : i32
    %c0_i32 = arith.constant 0 : i32
    %22 = arith.cmpi eq, %c16_i32, %c0_i32 : i32
    %c1_i32 = arith.constant 1 : i32
    %23 = arith.select %22, %c1_i32, %c16_i32 : i32
    %24 = vector.broadcast %23 : i32 to vector<1x256xi32>
    %25 = arith.remsi %21, %24 : vector<1x256xi32>
    %c0_i32_20 = arith.constant 0 : i32
    %26 = vector.broadcast %c0_i32_20 : i32 to vector<1x256xi32>
    %27 = arith.cmpi ne, %25, %26 : vector<1x256xi32>
    %c0_i32_21 = arith.constant 0 : i32
    %28 = vector.broadcast %c0_i32_21 : i32 to vector<1x256xi32>
    %29 = arith.cmpi slt, %25, %28 : vector<1x256xi32>
    %c0_i32_22 = arith.constant 0 : i32
    %30 = arith.cmpi slt, %23, %c0_i32_22 : i32
    %31 = vector.broadcast %30 : i1 to vector<1x256xi1>
    %32 = vector.broadcast %31 : vector<1x256xi1> to vector<1x256xi1>
    %33 = arith.xori %29, %32 : vector<1x256xi1>
    %34 = arith.andi %33, %27 : vector<1x256xi1>
    %35 = vector.broadcast %23 : i32 to vector<1x256xi32>
    %36 = arith.addi %25, %35 : vector<1x256xi32>
    %37 = arith.select %34, %36, %25 : vector<1x256xi1>, vector<1x256xi32>
    %c0_i32_23 = arith.constant 0 : i32
    %38 = vector.broadcast %c0_i32_23 : i32 to vector<1x256xi32>
    %39 = arith.cmpi ne, %37, %38 : vector<1x256xi32>
    %c15_i32 = arith.constant 15 : i32
    %40 = vector.broadcast %c15_i32 : i32 to vector<1x256xi32>
    %41 = arith.cmpi ne, %37, %40 : vector<1x256xi32>
    %cst_24 = arith.constant 0.000000e+00 : f32
    %42 = vector.broadcast %cst_24 : f32 to vector<4x304xf32>
    %c0_25 = arith.constant 0 : index
    %c0_26 = arith.constant 0 : index
    %43 = vector.load %arg9[%c0_25, %c0_26] : memref<4x304xf32, #tpu.memory_space<vmem>>, vector<4x304xf32>
    tpu.vector_store %arg9[%c0_25, %c0_26], %42 {strides = array<i32>} : memref<4x304xf32, #tpu.memory_space<vmem>>, vector<4x304xf32>,
    %c0_27 = arith.constant 0 : index
    %c24 = arith.constant 24 : index
    %44 = vector.load %arg9[%c0_27, %c24] : memref<4x304xf32, #tpu.memory_space<vmem>>, vector<4x256xf32>
    tpu.vector_store %arg9[%c0_27, %c24], %20 {strides = array<i32>} : memref<4x304xf32, #tpu.memory_space<vmem>>, vector<4x256xf32>,
    %cst_28 = arith.constant 0.000000e+00 : f32
    %45 = vector.broadcast %cst_28 : f32 to vector<4x256xf32>
    %c0_29 = arith.constant 0 : index
    %c0_30 = arith.constant 0 : index
    %46 = vector.load %arg5[%c0_29, %c0_30] : memref<4x36xf32, #tpu.memory_space<vmem>>, vector<4x4xf32>
    %c0_31 = arith.constant 0 : index
    %c7 = arith.constant 7 : index
    %47 = vector.load %arg9[%c0_31, %c7] : memref<4x304xf32, #tpu.memory_space<vmem>>, vector<4x256xf32>
    %cst_32 = arith.constant 0.000000e+00 : f32
    %48 = vector.shape_cast %39 : vector<1x256xi1> to vector<1x256xi1>
    %49 = vector.broadcast %48 : vector<1x256xi1> to vector<4x256xi1>
    %50 = vector.broadcast %cst_32 : f32 to vector<4x256xf32>
    %51 = arith.select %49, %47, %50 : vector<4x256xi1>, vector<4x256xf32>
    %cst_33 = arith.constant dense<0.000000e+00> : vector<4x256xf32>
    %52 = tpu.matmul %46, %51, %cst_33 {dimension_numbers = #tpu.dot_dimension_numbers<[1], [0], [0], [1], [0, 0, 1, 1], [], []>} : vector<4x4xf32>, vector<4x256xf32>, vector<4x256xf32> -> vector<4x256xf32>
    %53 = arith.addf %45, %52 : vector<4x256xf32>
    %c0_34 = arith.constant 0 : index
    %c4_35 = arith.constant 4 : index
    %54 = vector.load %arg5[%c0_34, %c4_35] : memref<4x36xf32, #tpu.memory_space<vmem>>, vector<4x4xf32>
    %c0_36 = arith.constant 0 : index
    %c8_37 = arith.constant 8 : index
    %55 = vector.load %arg9[%c0_36, %c8_37] : memref<4x304xf32, #tpu.memory_space<vmem>>, vector<4x256xf32>
    %cst_38 = arith.constant dense<0.000000e+00> : vector<4x256xf32>
    %56 = tpu.matmul %54, %55, %cst_38 {dimension_numbers = #tpu.dot_dimension_numbers<[1], [0], [0], [1], [0, 0, 1, 1], [], []>} : vector<4x4xf32>, vector<4x256xf32>, vector<4x256xf32> -> vector<4x256xf32>
    %57 = arith.addf %53, %56 : vector<4x256xf32>
    %c0_39 = arith.constant 0 : index
    %c8_40 = arith.constant 8 : index
    %58 = vector.load %arg5[%c0_39, %c8_40] : memref<4x36xf32, #tpu.memory_space<vmem>>, vector<4x4xf32>
    %c0_41 = arith.constant 0 : index
    %c9 = arith.constant 9 : index
    %59 = vector.load %arg9[%c0_41, %c9] : memref<4x304xf32, #tpu.memory_space<vmem>>, vector<4x256xf32>
    %cst_42 = arith.constant 0.000000e+00 : f32
    %60 = vector.shape_cast %41 : vector<1x256xi1> to vector<1x256xi1>
    %61 = vector.broadcast %60 : vector<1x256xi1> to vector<4x256xi1>
    %62 = vector.broadcast %cst_42 : f32 to vector<4x256xf32>
    %63 = arith.select %61, %59, %62 : vector<4x256xi1>, vector<4x256xf32>
    %cst_43 = arith.constant dense<0.000000e+00> : vector<4x256xf32>
    %64 = tpu.matmul %58, %63, %cst_43 {dimension_numbers = #tpu.dot_dimension_numbers<[1], [0], [0], [1], [0, 0, 1, 1], [], []>} : vector<4x4xf32>, vector<4x256xf32>, vector<4x256xf32> -> vector<4x256xf32>
    %65 = arith.addf %57, %64 : vector<4x256xf32>
    %c0_44 = arith.constant 0 : index
    %c12 = arith.constant 12 : index
    %66 = vector.load %arg5[%c0_44, %c12] : memref<4x36xf32, #tpu.memory_space<vmem>>, vector<4x4xf32>
    %c0_45 = arith.constant 0 : index
    %c23 = arith.constant 23 : index
    %67 = vector.load %arg9[%c0_45, %c23] : memref<4x304xf32, #tpu.memory_space<vmem>>, vector<4x256xf32>
    %cst_46 = arith.constant 0.000000e+00 : f32
    %68 = vector.shape_cast %39 : vector<1x256xi1> to vector<1x256xi1>
    %69 = vector.broadcast %68 : vector<1x256xi1> to vector<4x256xi1>
    %70 = vector.broadcast %cst_46 : f32 to vector<4x256xf32>
    %71 = arith.select %69, %67, %70 : vector<4x256xi1>, vector<4x256xf32>
    %cst_47 = arith.constant dense<0.000000e+00> : vector<4x256xf32>
    %72 = tpu.matmul %66, %71, %cst_47 {dimension_numbers = #tpu.dot_dimension_numbers<[1], [0], [0], [1], [0, 0, 1, 1], [], []>} : vector<4x4xf32>, vector<4x256xf32>, vector<4x256xf32> -> vector<4x256xf32>
    %73 = arith.addf %65, %72 : vector<4x256xf32>
    %c0_48 = arith.constant 0 : index
    %c16 = arith.constant 16 : index
    %74 = vector.load %arg5[%c0_48, %c16] : memref<4x36xf32, #tpu.memory_space<vmem>>, vector<4x4xf32>
    %c0_49 = arith.constant 0 : index
    %c24_50 = arith.constant 24 : index
    %75 = vector.load %arg9[%c0_49, %c24_50] : memref<4x304xf32, #tpu.memory_space<vmem>>, vector<4x256xf32>
    %cst_51 = arith.constant dense<0.000000e+00> : vector<4x256xf32>
    %76 = tpu.matmul %74, %75, %cst_51 {dimension_numbers = #tpu.dot_dimension_numbers<[1], [0], [0], [1], [0, 0, 1, 1], [], []>} : vector<4x4xf32>, vector<4x256xf32>, vector<4x256xf32> -> vector<4x256xf32>
    %77 = arith.addf %73, %76 : vector<4x256xf32>
    %c0_52 = arith.constant 0 : index
    %c20 = arith.constant 20 : index
    %78 = vector.load %arg5[%c0_52, %c20] : memref<4x36xf32, #tpu.memory_space<vmem>>, vector<4x4xf32>
    %c0_53 = arith.constant 0 : index
    %c25 = arith.constant 25 : index
    %79 = vector.load %arg9[%c0_53, %c25] : memref<4x304xf32, #tpu.memory_space<vmem>>, vector<4x256xf32>
    %cst_54 = arith.constant 0.000000e+00 : f32
    %80 = vector.shape_cast %41 : vector<1x256xi1> to vector<1x256xi1>
    %81 = vector.broadcast %80 : vector<1x256xi1> to vector<4x256xi1>
    %82 = vector.broadcast %cst_54 : f32 to vector<4x256xf32>
    %83 = arith.select %81, %79, %82 : vector<4x256xi1>, vector<4x256xf32>
    %cst_55 = arith.constant dense<0.000000e+00> : vector<4x256xf32>
    %84 = tpu.matmul %78, %83, %cst_55 {dimension_numbers = #tpu.dot_dimension_numbers<[1], [0], [0], [1], [0, 0, 1, 1], [], []>} : vector<4x4xf32>, vector<4x256xf32>, vector<4x256xf32> -> vector<4x256xf32>
    %85 = arith.addf %77, %84 : vector<4x256xf32>
    %c0_56 = arith.constant 0 : index
    %c24_57 = arith.constant 24 : index
    %86 = vector.load %arg5[%c0_56, %c24_57] : memref<4x36xf32, #tpu.memory_space<vmem>>, vector<4x4xf32>
    %c0_58 = arith.constant 0 : index
    %c39 = arith.constant 39 : index
    %87 = vector.load %arg9[%c0_58, %c39] : memref<4x304xf32, #tpu.memory_space<vmem>>, vector<4x256xf32>
    %cst_59 = arith.constant 0.000000e+00 : f32
    %88 = vector.shape_cast %39 : vector<1x256xi1> to vector<1x256xi1>
    %89 = vector.broadcast %88 : vector<1x256xi1> to vector<4x256xi1>
    %90 = vector.broadcast %cst_59 : f32 to vector<4x256xf32>
    %91 = arith.select %89, %87, %90 : vector<4x256xi1>, vector<4x256xf32>
    %cst_60 = arith.constant dense<0.000000e+00> : vector<4x256xf32>
    %92 = tpu.matmul %86, %91, %cst_60 {dimension_numbers = #tpu.dot_dimension_numbers<[1], [0], [0], [1], [0, 0, 1, 1], [], []>} : vector<4x4xf32>, vector<4x256xf32>, vector<4x256xf32> -> vector<4x256xf32>
    %93 = arith.addf %85, %92 : vector<4x256xf32>
    %c0_61 = arith.constant 0 : index
    %c28 = arith.constant 28 : index
    %94 = vector.load %arg5[%c0_61, %c28] : memref<4x36xf32, #tpu.memory_space<vmem>>, vector<4x4xf32>
    %c0_62 = arith.constant 0 : index
    %c40 = arith.constant 40 : index
    %95 = vector.load %arg9[%c0_62, %c40] : memref<4x304xf32, #tpu.memory_space<vmem>>, vector<4x256xf32>
    %cst_63 = arith.constant dense<0.000000e+00> : vector<4x256xf32>
    %96 = tpu.matmul %94, %95, %cst_63 {dimension_numbers = #tpu.dot_dimension_numbers<[1], [0], [0], [1], [0, 0, 1, 1], [], []>} : vector<4x4xf32>, vector<4x256xf32>, vector<4x256xf32> -> vector<4x256xf32>
    %97 = arith.addf %93, %96 : vector<4x256xf32>
    %c0_64 = arith.constant 0 : index
    %c32 = arith.constant 32 : index
    %98 = vector.load %arg5[%c0_64, %c32] : memref<4x36xf32, #tpu.memory_space<vmem>>, vector<4x4xf32>
    %c0_65 = arith.constant 0 : index
    %c41 = arith.constant 41 : index
    %99 = vector.load %arg9[%c0_65, %c41] : memref<4x304xf32, #tpu.memory_space<vmem>>, vector<4x256xf32>
    %cst_66 = arith.constant 0.000000e+00 : f32
    %100 = vector.shape_cast %41 : vector<1x256xi1> to vector<1x256xi1>
    %101 = vector.broadcast %100 : vector<1x256xi1> to vector<4x256xi1>
    %102 = vector.broadcast %cst_66 : f32 to vector<4x256xf32>
    %103 = arith.select %101, %99, %102 : vector<4x256xi1>, vector<4x256xf32>
    %cst_67 = arith.constant dense<0.000000e+00> : vector<4x256xf32>
    %104 = tpu.matmul %98, %103, %cst_67 {dimension_numbers = #tpu.dot_dimension_numbers<[1], [0], [0], [1], [0, 0, 1, 1], [], []>} : vector<4x4xf32>, vector<4x256xf32>, vector<4x256xf32> -> vector<4x256xf32>
    %105 = arith.addf %97, %104 : vector<4x256xf32>
    %106 = vector.broadcast %2 : vector<4x1xf32> to vector<4x256xf32>
    %107 = arith.addf %105, %106 : vector<4x256xf32>
    %cst_68 = arith.constant 0.000000e+00 : f32
    %108 = vector.broadcast %cst_68 : f32 to vector<4x256xf32>
    %109 = arith.cmpf ogt, %107, %108 : vector<4x256xf32>
    %110 = vector.broadcast %3 : vector<4x1xf32> to vector<4x256xf32>
    %111 = arith.mulf %110, %107 : vector<4x256xf32>
    %112 = arith.select %109, %107, %111 : vector<4x256xi1>, vector<4x256xf32>
    %cst_69 = arith.constant 0.000000e+00 : f32
    %113 = vector.broadcast %cst_69 : f32 to vector<8x304xf32>
    %c0_70 = arith.constant 0 : index
    %c0_71 = arith.constant 0 : index
    %114 = vector.load %arg10[%c0_70, %c0_71] : memref<8x304xf32, #tpu.memory_space<vmem>>, vector<8x304xf32>
    tpu.vector_store %arg10[%c0_70, %c0_71], %113 {strides = array<i32>} : memref<8x304xf32, #tpu.memory_space<vmem>>, vector<8x304xf32>,
    %c0_72 = arith.constant 0 : index
    %c24_73 = arith.constant 24 : index
    %115 = vector.load %arg10[%c0_72, %c24_73] : memref<8x304xf32, #tpu.memory_space<vmem>>, vector<4x256xf32>
    tpu.vector_store %arg10[%c0_72, %c24_73], %112 {strides = array<i32>} : memref<8x304xf32, #tpu.memory_space<vmem>>, vector<4x256xf32>,
    %c4_74 = arith.constant 4 : index
    %c24_75 = arith.constant 24 : index
    %116 = vector.load %arg10[%c4_74, %c24_75] : memref<8x304xf32, #tpu.memory_space<vmem>>, vector<4x256xf32>
    tpu.vector_store %arg10[%c4_74, %c24_75], %16 {strides = array<i32>} : memref<8x304xf32, #tpu.memory_space<vmem>>, vector<4x256xf32>,
    %cst_76 = arith.constant 0.000000e+00 : f32
    %117 = vector.broadcast %cst_76 : f32 to vector<16x256xf32>
    %c0_77 = arith.constant 0 : index
    %c0_78 = arith.constant 0 : index
    %118 = vector.load %arg6[%c0_77, %c0_78] : memref<16x72xf32, #tpu.memory_space<vmem>>, vector<16x8xf32>
    %c0_79 = arith.constant 0 : index
    %c7_80 = arith.constant 7 : index
    %119 = vector.load %arg10[%c0_79, %c7_80] : memref<8x304xf32, #tpu.memory_space<vmem>>, vector<8x256xf32>
    %cst_81 = arith.constant 0.000000e+00 : f32
    %120 = vector.shape_cast %39 : vector<1x256xi1> to vector<1x256xi1>
    %121 = vector.broadcast %120 : vector<1x256xi1> to vector<8x256xi1>
    %122 = vector.broadcast %cst_81 : f32 to vector<8x256xf32>
    %123 = arith.select %121, %119, %122 : vector<8x256xi1>, vector<8x256xf32>
    %cst_82 = arith.constant dense<0.000000e+00> : vector<16x256xf32>
    %124 = tpu.matmul %118, %123, %cst_82 {dimension_numbers = #tpu.dot_dimension_numbers<[1], [0], [0], [1], [0, 0, 1, 1], [], []>} : vector<16x8xf32>, vector<8x256xf32>, vector<16x256xf32> -> vector<16x256xf32>
    %125 = arith.addf %117, %124 : vector<16x256xf32>
    %c0_83 = arith.constant 0 : index
    %c8_84 = arith.constant 8 : index
    %126 = vector.load %arg6[%c0_83, %c8_84] : memref<16x72xf32, #tpu.memory_space<vmem>>, vector<16x8xf32>
    %c0_85 = arith.constant 0 : index
    %c8_86 = arith.constant 8 : index
    %127 = vector.load %arg10[%c0_85, %c8_86] : memref<8x304xf32, #tpu.memory_space<vmem>>, vector<8x256xf32>
    %cst_87 = arith.constant dense<0.000000e+00> : vector<16x256xf32>
    %128 = tpu.matmul %126, %127, %cst_87 {dimension_numbers = #tpu.dot_dimension_numbers<[1], [0], [0], [1], [0, 0, 1, 1], [], []>} : vector<16x8xf32>, vector<8x256xf32>, vector<16x256xf32> -> vector<16x256xf32>
    %129 = arith.addf %125, %128 : vector<16x256xf32>
    %c0_88 = arith.constant 0 : index
    %c16_89 = arith.constant 16 : index
    %130 = vector.load %arg6[%c0_88, %c16_89] : memref<16x72xf32, #tpu.memory_space<vmem>>, vector<16x8xf32>
    %c0_90 = arith.constant 0 : index
    %c9_91 = arith.constant 9 : index
    %131 = vector.load %arg10[%c0_90, %c9_91] : memref<8x304xf32, #tpu.memory_space<vmem>>, vector<8x256xf32>
    %cst_92 = arith.constant 0.000000e+00 : f32
    %132 = vector.shape_cast %41 : vector<1x256xi1> to vector<1x256xi1>
    %133 = vector.broadcast %132 : vector<1x256xi1> to vector<8x256xi1>
    %134 = vector.broadcast %cst_92 : f32 to vector<8x256xf32>
    %135 = arith.select %133, %131, %134 : vector<8x256xi1>, vector<8x256xf32>
    %cst_93 = arith.constant dense<0.000000e+00> : vector<16x256xf32>
    %136 = tpu.matmul %130, %135, %cst_93 {dimension_numbers = #tpu.dot_dimension_numbers<[1], [0], [0], [1], [0, 0, 1, 1], [], []>} : vector<16x8xf32>, vector<8x256xf32>, vector<16x256xf32> -> vector<16x256xf32>
    %137 = arith.addf %129, %136 : vector<16x256xf32>
    %c0_94 = arith.constant 0 : index
    %c24_95 = arith.constant 24 : index
    %138 = vector.load %arg6[%c0_94, %c24_95] : memref<16x72xf32, #tpu.memory_space<vmem>>, vector<16x8xf32>
    %c0_96 = arith.constant 0 : index
    %c23_97 = arith.constant 23 : index
    %139 = vector.load %arg10[%c0_96, %c23_97] : memref<8x304xf32, #tpu.memory_space<vmem>>, vector<8x256xf32>
    %cst_98 = arith.constant 0.000000e+00 : f32
    %140 = vector.shape_cast %39 : vector<1x256xi1> to vector<1x256xi1>
    %141 = vector.broadcast %140 : vector<1x256xi1> to vector<8x256xi1>
    %142 = vector.broadcast %cst_98 : f32 to vector<8x256xf32>
    %143 = arith.select %141, %139, %142 : vector<8x256xi1>, vector<8x256xf32>
    %cst_99 = arith.constant dense<0.000000e+00> : vector<16x256xf32>
    %144 = tpu.matmul %138, %143, %cst_99 {dimension_numbers = #tpu.dot_dimension_numbers<[1], [0], [0], [1], [0, 0, 1, 1], [], []>} : vector<16x8xf32>, vector<8x256xf32>, vector<16x256xf32> -> vector<16x256xf32>
    %145 = arith.addf %137, %144 : vector<16x256xf32>
    %c0_100 = arith.constant 0 : index
    %c32_101 = arith.constant 32 : index
    %146 = vector.load %arg6[%c0_100, %c32_101] : memref<16x72xf32, #tpu.memory_space<vmem>>, vector<16x8xf32>
    %c0_102 = arith.constant 0 : index
    %c24_103 = arith.constant 24 : index
    %147 = vector.load %arg10[%c0_102, %c24_103] : memref<8x304xf32, #tpu.memory_space<vmem>>, vector<8x256xf32>
    %cst_104 = arith.constant dense<0.000000e+00> : vector<16x256xf32>
    %148 = tpu.matmul %146, %147, %cst_104 {dimension_numbers = #tpu.dot_dimension_numbers<[1], [0], [0], [1], [0, 0, 1, 1], [], []>} : vector<16x8xf32>, vector<8x256xf32>, vector<16x256xf32> -> vector<16x256xf32>
    %149 = arith.addf %145, %148 : vector<16x256xf32>
    %c0_105 = arith.constant 0 : index
    %c40_106 = arith.constant 40 : index
    %150 = vector.load %arg6[%c0_105, %c40_106] : memref<16x72xf32, #tpu.memory_space<vmem>>, vector<16x8xf32>
    %c0_107 = arith.constant 0 : index
    %c25_108 = arith.constant 25 : index
    %151 = vector.load %arg10[%c0_107, %c25_108] : memref<8x304xf32, #tpu.memory_space<vmem>>, vector<8x256xf32>
    %cst_109 = arith.constant 0.000000e+00 : f32
    %152 = vector.shape_cast %41 : vector<1x256xi1> to vector<1x256xi1>
    %153 = vector.broadcast %152 : vector<1x256xi1> to vector<8x256xi1>
    %154 = vector.broadcast %cst_109 : f32 to vector<8x256xf32>
    %155 = arith.select %153, %151, %154 : vector<8x256xi1>, vector<8x256xf32>
    %cst_110 = arith.constant dense<0.000000e+00> : vector<16x256xf32>
    %156 = tpu.matmul %150, %155, %cst_110 {dimension_numbers = #tpu.dot_dimension_numbers<[1], [0], [0], [1], [0, 0, 1, 1], [], []>} : vector<16x8xf32>, vector<8x256xf32>, vector<16x256xf32> -> vector<16x256xf32>
    %157 = arith.addf %149, %156 : vector<16x256xf32>
    %c0_111 = arith.constant 0 : index
    %c48 = arith.constant 48 : index
    %158 = vector.load %arg6[%c0_111, %c48] : memref<16x72xf32, #tpu.memory_space<vmem>>, vector<16x8xf32>
    %c0_112 = arith.constant 0 : index
    %c39_113 = arith.constant 39 : index
    %159 = vector.load %arg10[%c0_112, %c39_113] : memref<8x304xf32, #tpu.memory_space<vmem>>, vector<8x256xf32>
    %cst_114 = arith.constant 0.000000e+00 : f32
    %160 = vector.shape_cast %39 : vector<1x256xi1> to vector<1x256xi1>
    %161 = vector.broadcast %160 : vector<1x256xi1> to vector<8x256xi1>
    %162 = vector.broadcast %cst_114 : f32 to vector<8x256xf32>
    %163 = arith.select %161, %159, %162 : vector<8x256xi1>, vector<8x256xf32>
    %cst_115 = arith.constant dense<0.000000e+00> : vector<16x256xf32>
    %164 = tpu.matmul %158, %163, %cst_115 {dimension_numbers = #tpu.dot_dimension_numbers<[1], [0], [0], [1], [0, 0, 1, 1], [], []>} : vector<16x8xf32>, vector<8x256xf32>, vector<16x256xf32> -> vector<16x256xf32>
    %165 = arith.addf %157, %164 : vector<16x256xf32>
    %c0_116 = arith.constant 0 : index
    %c56 = arith.constant 56 : index
    %166 = vector.load %arg6[%c0_116, %c56] : memref<16x72xf32, #tpu.memory_space<vmem>>, vector<16x8xf32>
    %c0_117 = arith.constant 0 : index
    %c40_118 = arith.constant 40 : index
    %167 = vector.load %arg10[%c0_117, %c40_118] : memref<8x304xf32, #tpu.memory_space<vmem>>, vector<8x256xf32>
    %cst_119 = arith.constant dense<0.000000e+00> : vector<16x256xf32>
    %168 = tpu.matmul %166, %167, %cst_119 {dimension_numbers = #tpu.dot_dimension_numbers<[1], [0], [0], [1], [0, 0, 1, 1], [], []>} : vector<16x8xf32>, vector<8x256xf32>, vector<16x256xf32> -> vector<16x256xf32>
    %169 = arith.addf %165, %168 : vector<16x256xf32>
    %c0_120 = arith.constant 0 : index
    %c64 = arith.constant 64 : index
    %170 = vector.load %arg6[%c0_120, %c64] : memref<16x72xf32, #tpu.memory_space<vmem>>, vector<16x8xf32>
    %c0_121 = arith.constant 0 : index
    %c41_122 = arith.constant 41 : index
    %171 = vector.load %arg10[%c0_121, %c41_122] : memref<8x304xf32, #tpu.memory_space<vmem>>, vector<8x256xf32>
    %cst_123 = arith.constant 0.000000e+00 : f32
    %172 = vector.shape_cast %41 : vector<1x256xi1> to vector<1x256xi1>
    %173 = vector.broadcast %172 : vector<1x256xi1> to vector<8x256xi1>
    %174 = vector.broadcast %cst_123 : f32 to vector<8x256xf32>
    %175 = arith.select %173, %171, %174 : vector<8x256xi1>, vector<8x256xf32>
    %cst_124 = arith.constant dense<0.000000e+00> : vector<16x256xf32>
    %176 = tpu.matmul %170, %175, %cst_124 {dimension_numbers = #tpu.dot_dimension_numbers<[1], [0], [0], [1], [0, 0, 1, 1], [], []>} : vector<16x8xf32>, vector<8x256xf32>, vector<16x256xf32> -> vector<16x256xf32>
    %177 = arith.addf %169, %176 : vector<16x256xf32>
    %178 = vector.broadcast %4 : vector<16x1xf32> to vector<16x256xf32>
    %179 = arith.addf %177, %178 : vector<16x256xf32>
    %cst_125 = arith.constant 0.000000e+00 : f32
    %180 = vector.broadcast %cst_125 : f32 to vector<16x256xf32>
    %181 = arith.cmpf ogt, %179, %180 : vector<16x256xf32>
    %182 = vector.broadcast %5 : vector<16x1xf32> to vector<16x256xf32>
    %183 = arith.mulf %182, %179 : vector<16x256xf32>
    %184 = arith.select %181, %179, %183 : vector<16x256xi1>, vector<16x256xf32>
    %c0_126 = arith.constant 0 : index
    %c0_127 = arith.constant 0 : index
    %c0_128 = arith.constant 0 : index
    %185 = vector.load %arg8[%c0_126, %c0_127, %c0_128] : memref<1x16x256xf32, #tpu.memory_space<vmem>>, vector<1x16x256xf32>
    %186 = vector.shape_cast %185 : vector<1x16x256xf32> to vector<16x256xf32>
    %187 = vector.shape_cast %184 : vector<16x256xf32> to vector<1x16x256xf32>
    tpu.vector_store %arg8[%c0_126, %c0_127, %c0_128], %187 {strides = array<i32>} : memref<1x16x256xf32, #tpu.memory_space<vmem>>, vector<1x16x256xf32>,
    return
  }
  func.func @transform_0(%arg0: i32) -> (i32, i32, i32) {
    %c0_i32 = arith.constant 0 : i32
    %c0_i32_0 = arith.constant 0 : i32
    %c0_i32_1 = arith.constant 0 : i32
    return %arg0, %c0_i32, %c0_i32_0 : i32, i32, i32
  }
  func.func @transform_1(%arg0: i32) -> (i32, i32, i32) {
    %c0_i32 = arith.constant 0 : i32
    %c0_i32_0 = arith.constant 0 : i32
    %c0_i32_1 = arith.constant 0 : i32
    return %arg0, %c0_i32, %c0_i32_0 : i32, i32, i32
  }
  func.func @transform_2(%arg0: i32) -> (i32, i32) {
    %c0_i32 = arith.constant 0 : i32
    %c0_i32_0 = arith.constant 0 : i32
    %c0_i32_1 = arith.constant 0 : i32
    return %c0_i32, %c0_i32_0 : i32, i32
  }
  func.func @transform_3(%arg0: i32) -> (i32, i32) {
    %c0_i32 = arith.constant 0 : i32
    %c0_i32_0 = arith.constant 0 : i32
    %c0_i32_1 = arith.constant 0 : i32
    return %c0_i32, %c0_i32_0 : i32, i32
  }
  func.func @transform_4(%arg0: i32) -> (i32, i32) {
    %c0_i32 = arith.constant 0 : i32
    %c0_i32_0 = arith.constant 0 : i32
    %c0_i32_1 = arith.constant 0 : i32
    return %c0_i32, %c0_i32_0 : i32, i32
  }
  func.func @transform_5(%arg0: i32) -> (i32, i32) {
    %c0_i32 = arith.constant 0 : i32
    %c0_i32_0 = arith.constant 0 : i32
    %c0_i32_1 = arith.constant 0 : i32
    return %c0_i32, %c0_i32_0 : i32, i32
  }
  func.func @transform_6(%arg0: i32) -> (i32, i32) {
    %c0_i32 = arith.constant 0 : i32
    %c0_i32_0 = arith.constant 0 : i32
    %c0_i32_1 = arith.constant 0 : i32
    return %c0_i32, %c0_i32_0 : i32, i32
  }
  func.func @transform_7(%arg0: i32) -> (i32, i32, i32) {
    %c0_i32 = arith.constant 0 : i32
    %c0_i32_0 = arith.constant 0 : i32
    %c0_i32_1 = arith.constant 0 : i32
    return %arg0, %c0_i32, %c0_i32_0 : i32, i32, i32
  }
}

</mosaic_0001>

<llo_original>
// kernel: dsc_module_forward.1
$region0: #{dsc_module_forward.1}
  #allocation0 [shape = 'u32[]', space=smem, size = 0x4, offset = 0x4, fixed_abs, tag = 'smem constant byte address 0x4 - core index']
  #allocation1 [shape = 'u32[72,128]{1,0:T(1,128)}', space=vmem, size = 0x9000, scoped, tag = 'internal scratch']
  #allocation2 [shape = 'f32[4,304]{1,0:T(4,128)}', space=vmem, size = 0x1800, scoped, tag = 'scratch operand']
  #allocation3 [shape = 'f32[8,304]{1,0:T(8,128)}', space=vmem, size = 0x3000, scoped, tag = 'scratch operand']
  %s0 = inlined_call_operand.vmem [shape: f32[2,4,256], index: 0, kind: input, shape index: {}]
  %s1 = inlined_call_operand.vmem [shape: f32[2,4,64], index: 1, kind: input, shape index: {}]
  %s2 = inlined_call_operand.vmem [shape: f32[64,256], index: 2, kind: input, shape index: {}]
  %s3 = inlined_call_operand.vmem [shape: f32[4,4], index: 3, kind: input, shape index: {}]
  %s4 = inlined_call_operand.vmem [shape: f32[4,36], index: 4, kind: input, shape index: {}]
  %s5 = inlined_call_operand.vmem [shape: f32[16,72], index: 5, kind: input, shape index: {}]
  %s6 = inlined_call_operand.vmem [shape: f32[24,2], index: 6, kind: input, shape index: {}]
  %s7 = inlined_call_operand.vmem [shape: f32[2,16,256], index: 7, kind: output, shape index: {}]
  %s8 = sld [smem:[#allocation0]]
  $region61: #{dsc_module_forward.1} parent=0
    _
  %s10 = ssub.s32 1, %s8
  %s11 = scalar_select 0, %s10, %s8
  loop: start=0, step=1, limit=4
  $region2: #{dsc_module_forward.1} parent=0 // loop_pre_header
    _
  $region3: #{dsc_module_forward.1} parent=0 // loop_header
    %s13 = sphi 0, %s17
    %p14 = scmp.ge.s32.totalorder %s13, 4
    %s23 = sphi 0, %s25
    %s26 = sphi 0, %s23
    %s27 = sphi 0, %s26
    %s43 = sphi 0, %s27
    %s49 = sphi 0, %s51
    %s52 = sphi 0, %s49
    %s53 = sphi 0, %s52
    %s69 = sphi 0, %s53
    %s73 = sphi 0, %s73
    %s75 = sphi 0, %s73
    %s76 = sphi 0, %s75
    %s90 = sphi 0, %s76
    %s94 = sphi 0, %s94
    %s96 = sphi 0, %s94
    %s97 = sphi 0, %s96
    %s111 = sphi 0, %s97
    %s115 = sphi 0, %s115
    %s117 = sphi 0, %s115
    %s118 = sphi 0, %s117
    %s132 = sphi 0, %s118
    %s136 = sphi 0, %s136
    %s138 = sphi 0, %s136
    %s139 = sphi 0, %s138
    %s153 = sphi 0, %s139
    %s157 = sphi 0, %s157
    %s159 = sphi 0, %s157
    %s160 = sphi 0, %s159
    %s174 = sphi 0, %s160
    %s180 = sphi 0, %s182
    %s183 = sphi 0, %s180
    %s184 = sphi 0, %s183
    %s200 = sphi 0, %s184
  $region4: #{dsc_module_forward.1} parent=0 // loop_header_branch
    %16 = sbr.rel (%p14) target = $region8
  $region5: #{dsc_module_forward.1} parent=0 // loop_body
    %s18 = ssub.s32 %s13, 1
    %s19 = ssub.s32 %s13, 2
    %s20 = sadd.s32 %s13, 1
    %s21 = ssub.s32 %s13, %s20
    %p22 = scmp.eq.s32.totalorder %s21, 0
    %s24 = sadd.s32 %s23, 1
    %s25 = scalar_select %p22, %s23, %s24
    %p28 = pneg %p22
    %p29 = scmp.eq.s32.totalorder %s13, 1
    %p30 = por %p28, %p29
    %p31 = scmp.ne.s32.totalorder %s23, %s26
    %p32 = scmp.eq.s32.totalorder %s13, 0
    %p33 = por %p31, %p32
    %p34 = scmp.ne.s32.totalorder %s23, %s26
    %p35 = scmp.eq.s32.totalorder %s18, 1
    %p36 = por %p34, %p35
    %p37 = scmp.ne.s32.totalorder %s26, %s27
    %p38 = scmp.eq.s32.totalorder %s18, 0
    %p39 = por %p37, %p38
    %p40 = scmp.ne.s32.totalorder %s26, %s27
    %p41 = scmp.eq.s32.totalorder %s19, 1
    %p42 = por %p40, %p41
    %p44 = scmp.ne.s32.totalorder %s27, %s43
    %p45 = scmp.eq.s32.totalorder %s19, 0
    %p46 = por %p44, %p45
    %s47 = ssub.s32 %s13, %s20
    %p48 = scmp.eq.s32.totalorder %s47, 0
    %s50 = sadd.s32 %s49, 1
    %s51 = scalar_select %p48, %s49, %s50
    %p54 = pneg %p48
    %p55 = scmp.eq.s32.totalorder %s13, 1
    %p56 = por %p54, %p55
    %p57 = scmp.ne.s32.totalorder %s49, %s52
    %p58 = scmp.eq.s32.totalorder %s13, 0
    %p59 = por %p57, %p58
    %p60 = scmp.ne.s32.totalorder %s49, %s52
    %p61 = scmp.eq.s32.totalorder %s18, 1
    %p62 = por %p60, %p61
    %p63 = scmp.ne.s32.totalorder %s52, %s53
    %p64 = scmp.eq.s32.totalorder %s18, 0
    %p65 = por %p63, %p64
    %p66 = scmp.ne.s32.totalorder %s52, %s53
    %p67 = scmp.eq.s32.totalorder %s19, 1
    %p68 = por %p66, %p67
    %p70 = scmp.ne.s32.totalorder %s53, %s69
    %p71 = scmp.eq.s32.totalorder %s19, 0
    %p72 = por %p70, %p71
    %s74 = sadd.s32 %s73, 1
    %p77 = scmp.eq.s32.totalorder %s13, 1
    %p78 = scmp.ne.s32.totalorder %s73, %s75
    %p79 = scmp.eq.s32.totalorder %s13, 0
    %p80 = por %p78, %p79
    %p81 = scmp.ne.s32.totalorder %s73, %s75
    %p82 = scmp.eq.s32.totalorder %s18, 1
    %p83 = por %p81, %p82
    %p84 = scmp.ne.s32.totalorder %s75, %s76
    %p85 = scmp.eq.s32.totalorder %s18, 0
    %p86 = por %p84, %p85
    %p87 = scmp.ne.s32.totalorder %s75, %s76
    %p88 = scmp.eq.s32.totalorder %s19, 1
    %p89 = por %p87, %p88
    %p91 = scmp.ne.s32.totalorder %s76, %s90
    %p92 = scmp.eq.s32.totalorder %s19, 0
    %p93 = por %p91, %p92
    %s95 = sadd.s32 %s94, 1
    %p98 = scmp.eq.s32.totalorder %s13, 1
    %p99 = scmp.ne.s32.totalorder %s94, %s96
    %p100 = scmp.eq.s32.totalorder %s13, 0
    %p101 = por %p99, %p100
    %p102 = scmp.ne.s32.totalorder %s94, %s96
    %p103 = scmp.eq.s32.totalorder %s18, 1
    %p104 = por %p102, %p103
    %p105 = scmp.ne.s32.totalorder %s96, %s97
    %p106 = scmp.eq.s32.totalorder %s18, 0
    %p107 = por %p105, %p106
    %p108 = scmp.ne.s32.totalorder %s96, %s97
    %p109 = scmp.eq.s32.totalorder %s19, 1
    %p110 = por %p108, %p109
    %p112 = scmp.ne.s32.totalorder %s97, %s111
    %p113 = scmp.eq.s32.totalorder %s19, 0
    %p114 = por %p112, %p113
    %s116 = sadd.s32 %s115, 1
    %p119 = scmp.eq.s32.totalorder %s13, 1
    %p120 = scmp.ne.s32.totalorder %s115, %s117
    %p121 = scmp.eq.s32.totalorder %s13, 0
    %p122 = por %p120, %p121
    %p123 = scmp.ne.s32.totalorder %s115, %s117
    %p124 = scmp.eq.s32.totalorder %s18, 1
    %p125 = por %p123, %p124
    %p126 = scmp.ne.s32.totalorder %s117, %s118
    %p127 = scmp.eq.s32.totalorder %s18, 0
    %p128 = por %p126, %p127
    %p129 = scmp.ne.s32.totalorder %s117, %s118
    %p130 = scmp.eq.s32.totalorder %s19, 1
    %p131 = por %p129, %p130
    %p133 = scmp.ne.s32.totalorder %s118, %s132
    %p134 = scmp.eq.s32.totalorder %s19, 0
    %p135 = por %p133, %p134
    %s137 = sadd.s32 %s136, 1
    %p140 = scmp.eq.s32.totalorder %s13, 1
    %p141 = scmp.ne.s32.totalorder %s136, %s138
    %p142 = scmp.eq.s32.totalorder %s13, 0
    %p143 = por %p141, %p142
    %p144 = scmp.ne.s32.totalorder %s136, %s138
    %p145 = scmp.eq.s32.totalorder %s18, 1
    %p146 = por %p144, %p145
    %p147 = scmp.ne.s32.totalorder %s138, %s139
    %p148 = scmp.eq.s32.totalorder %s18, 0
    %p149 = por %p147, %p148
    %p150 = scmp.ne.s32.totalorder %s138, %s139
    %p151 = scmp.eq.s32.totalorder %s19, 1
    %p152 = por %p150, %p151
    %p154 = scmp.ne.s32.totalorder %s139, %s153
    %p155 = scmp.eq.s32.totalorder %s19, 0
    %p156 = por %p154, %p155
    %s158 = sadd.s32 %s157, 1
    %p161 = scmp.eq.s32.totalorder %s13, 1
    %p162 = scmp.ne.s32.totalorder %s157, %s159
    %p163 = scmp.eq.s32.totalorder %s13, 0
    %p164 = por %p162, %p163
    %p165 = scmp.ne.s32.totalorder %s157, %s159
    %p166 = scmp.eq.s32.totalorder %s18, 1
    %p167 = por %p165, %p166
    %p168 = scmp.ne.s32.totalorder %s159, %s160
    %p169 = scmp.eq.s32.totalorder %s18, 0
    %p170 = por %p168, %p169
    %p171 = scmp.ne.s32.totalorder %s159, %s160
    %p172 = scmp.eq.s32.totalorder %s19, 1
    %p173 = por %p171, %p172
    %p175 = scmp.ne.s32.totalorder %s160, %s174
    %p176 = scmp.eq.s32.totalorder %s19, 0
    %p177 = por %p175, %p176
    %s178 = ssub.s32 %s13, %s20
    %p179 = scmp.eq.s32.totalorder %s178, 0
    %s181 = sadd.s32 %s180, 1
    %s182 = scalar_select %p179, %s180, %s181
    %p185 = pneg %p179
    %p186 = scmp.eq.s32.totalorder %s13, 1
    %p187 = por %p185, %p186
    %p188 = scmp.ne.s32.totalorder %s180, %s183
    %p189 = scmp.eq.s32.totalorder %s13, 0
    %p190 = por %p188, %p189
    %p191 = scmp.ne.s32.totalorder %s180, %s183
    %p192 = scmp.eq.s32.totalorder %s18, 1
    %p193 = por %p191, %p192
    %p194 = scmp.ne.s32.totalorder %s183, %s184
    %p195 = scmp.eq.s32.totalorder %s18, 0
    %p196 = por %p194, %p195
    %p197 = scmp.ne.s32.totalorder %s183, %s184
    %p198 = scmp.eq.s32.totalorder %s19, 1
    %p199 = por %p197, %p198
    %p201 = scmp.ne.s32.totalorder %s184, %s200
    %p202 = scmp.eq.s32.totalorder %s19, 0
    %p203 = por %p201, %p202
    %p204 = scmp.le.s32.totalorder 1, %s13
    %p205 = scmp.lt.s32.totalorder %s13, 3
    %p206 = pnand %p204, %p205
    %p207 = pneg %p206
    // Predicated region
    $region9: #{dsc_module_forward.1} parent=5 // pred_check
      _
    $region10: #{dsc_module_forward.1} parent=5 // pred_check_branch
      %209 = sbr.rel (%p206) target = $region12
    $region11: #{dsc_module_forward.1} parent=5 // pred_region
      %s210 = ssub.s32 %s13, 1
      // Predicated region
      $region13: #{dsc_module_forward.1} parent=11 // pred_check
        %p211 = pneg %p86
      $region14: #{dsc_module_forward.1} parent=11 // pred_check_branch
        %213 = sbr.rel (%p211) target = $region16
      $region15: #{dsc_module_forward.1} parent=11 // pred_region
        _
      $region16: #{dsc_module_forward.1} parent=11 // pred_fallthru
        _
      // Predicated region
      $region17: #{dsc_module_forward.1} parent=11 // pred_check
        %p214 = pneg %p107
      $region18: #{dsc_module_forward.1} parent=11 // pred_check_branch
        %216 = sbr.rel (%p214) target = $region20
      $region19: #{dsc_module_forward.1} parent=11 // pred_region
        _
      $region20: #{dsc_module_forward.1} parent=11 // pred_fallthru
        _
      // Predicated region
      $region21: #{dsc_module_forward.1} parent=11 // pred_check
        %p217 = pneg %p128
      $region22: #{dsc_module_forward.1} parent=11 // pred_check_branch
        %219 = sbr.rel (%p217) target = $region24
      $region23: #{dsc_module_forward.1} parent=11 // pred_region
        _
      $region24: #{dsc_module_forward.1} parent=11 // pred_fallthru
        _
      // Predicated region
      $region25: #{dsc_module_forward.1} parent=11 // pred_check
        %p220 = pneg %p149
      $region26: #{dsc_module_forward.1} parent=11 // pred_check_branch
        %222 = sbr.rel (%p220) target = $region28
      $region27: #{dsc_module_forward.1} parent=11 // pred_region
        _
      $region28: #{dsc_module_forward.1} parent=11 // pred_fallthru
        _
      // Predicated region
      $region29: #{dsc_module_forward.1} parent=11 // pred_check
        %p223 = pneg %p170
      $region30: #{dsc_module_forward.1} parent=11 // pred_check_branch
        %225 = sbr.rel (%p223) target = $region32
      $region31: #{dsc_module_forward.1} parent=11 // pred_region
        _
      $region32: #{dsc_module_forward.1} parent=11 // pred_fallthru
        _
    $region12: #{dsc_module_forward.1} parent=5 // pred_fallthru
      _
    %p226 = scmp.lt.s32.totalorder %s13, 2
    // Predicated region
    $region33: #{dsc_module_forward.1} parent=5 // pred_check
      %p227 = pneg %p226
    $region34: #{dsc_module_forward.1} parent=5 // pred_check_branch
      %229 = sbr.rel (%p227) target = $region36
    $region35: #{dsc_module_forward.1} parent=5 // pred_region
      // Predicated region
      $region37: #{dsc_module_forward.1} parent=35 // pred_check
        %p230 = pneg %p33
      $region38: #{dsc_module_forward.1} parent=35 // pred_check_branch
        %232 = sbr.rel (%p230) target = $region40
      $region39: #{dsc_module_forward.1} parent=35 // pred_region
        %p233 = scmp.lt.s32.totalorder %s13, 1
        %s234 = scalar_select %p233, %s13, 1
        %s235 = smul.addr %s234, 2
        %s236 = smul.addr %s235, 4
        %s237 = scalar_lea.vmem %s0, %s236
      $region40: #{dsc_module_forward.1} parent=35 // pred_fallthru
        _
      // Predicated region
      $region41: #{dsc_module_forward.1} parent=35 // pred_check
        %p238 = pneg %p59
      $region42: #{dsc_module_forward.1} parent=35 // pred_check_branch
        %240 = sbr.rel (%p238) target = $region44
      $region43: #{dsc_module_forward.1} parent=35 // pred_region
        %p241 = scmp.lt.s32.totalorder %s13, 1
        %s242 = scalar_select %p241, %s13, 1
        %s243 = smul.addr %s242, 4
        %s244 = scalar_lea.vmem %s1, %s243
      $region44: #{dsc_module_forward.1} parent=35 // pred_fallthru
        _
    $region36: #{dsc_module_forward.1} parent=5 // pred_fallthru
      _
    %p245 = scmp.le.s32.totalorder 1, %s13
    %p246 = scmp.lt.s32.totalorder %s13, 3
    %p247 = pnand %p245, %p246
    %p248 = pneg %p247
    // Predicated region
    $region45: #{dsc_module_forward.1} parent=5 // pred_check
      _
    $region46: #{dsc_module_forward.1} parent=5 // pred_check_branch
      %250 = sbr.rel (%p247) target = $region48
    $region47: #{dsc_module_forward.1} parent=5 // pred_region
      %s251 = ssub.s32 %s13, 1
      %p252 = scmp.lt.s32.totalorder %s18, 1
      %s253 = scalar_select %p252, %s18, 1
      %s254 = smul.addr %s253, 2
      %s255 = smul.addr %s254, 4
      %s256 = scalar_lea.vmem %s0, %s255
      %p257 = pneg %p39
      %p258 = pneg %p36
      %p259 = scmp.lt.s32.totalorder %s18, 1
      %s260 = scalar_select %p259, %s18, 1
      %s261 = smul.addr %s260, 4
      %s262 = scalar_lea.vmem %s1, %s261
      %p263 = pneg %p65
      %p264 = pneg %p62
      %p265 = pneg %p86
      %p266 = pneg %p83
      %p267 = pneg %p107
      %p268 = pneg %p104
      %p269 = pneg %p128
      %p270 = pneg %p125
      %p271 = pneg %p149
      %p272 = pneg %p146
      %p273 = pneg %p170
      %p274 = pneg %p167
      %p275 = pneg %p196
      %p276 = pneg %p193
      %p277 = scmp.lt.s32.totalorder %s18, 1
      %s278 = scalar_select %p277, %s18, 1
      %s279 = smul.addr %s278, 4
      %s280 = smul.addr %s279, 8
      %s281 = scalar_lea.vmem %s7, %s280
      %p282 = scmp.lt.s32.totalorder %s18, 1
      %s283 = scalar_select %p282, %s18, 1
      %s284 = smul.addr %s283, 2
      %s285 = smul.addr %s284, 4
      %s286 = scalar_lea.vmem %s0, %s285
      %p287 = scmp.lt.s32.totalorder %s18, 1
      %s288 = scalar_select %p287, %s18, 1
      %s289 = smul.addr %s288, 4
      %s290 = scalar_lea.vmem %s1, %s289
      %p291 = scmp.lt.s32.totalorder %s18, 1
      %s292 = scalar_select %p291, %s18, 1
      %s293 = smul.addr %s292, 4
      %s294 = smul.addr %s293, 8
      %s295 = scalar_lea.vmem %s7, %s294
      %v296 = vld [vmem:[%s6] sm:$0xf]
      %v297 = vld [vmem:[%s6 + $0x4] sm:$0xf]
      %v298 = vld [vmem:[%s6 + $0x8] sm:$0xff]
      %v299 = vld [vmem:[%s6 + $0x10] sm:$0xff]
      %v300 = vld [vmem:[%s286] sm:$0xff]
      %v301 = vld [vmem:[%s3] sm:$0xf]
      %303 = vset.pattern.permute.xlu0 0
      %304 = vperm.xlu0 %303, %v296
      %v305 = vpop.permute.xlu0 %304
      %308 = vst [vmem:[#allocation1] ss:$2 sm:$0xff] %v300
      %v309 = vld.sshfl [vmem:[#allocation1] sm:$0xff pattern:$0x75316420]
      %v310 = vld.sshfl [vmem:[#allocation1 + $0x8] sm:$0xff pattern:$0x75316420]
      %vm311 = vcmask 31744
      %v313 = vsel %vm311, %v301, 0
      %vm315 = vcmask 1043456
      %v316 = vsel %vm315, %v309, 0
      %v318 = vsel %vm315, %v310, 0
      %320 = vmatpush.msra.mxu0 0.0
      %321 = vmatpush.msra.mxu0 0.0
      %322 = vmatpush.msra.mxu0 0.0
      %323 = vmatpush.msra.mxu0 0.0
      %324 = vmatpush.msra.mxu0 0.0
      %325 = vmatpush.msra.mxu0 0.0
      %326 = vmatpush.msra.mxu0 0.0
      %327 = vmatpush.msra.mxu0 0.0
      %328 = vmatpush.msra.mxu0 0.0
      %329 = vmatpush.msra.mxu0 0.0
      %330 = vmatpush.msra.mxu0 0.0
      %331 = vmatpush.msra.mxu0 0.0
      %332 = vmatpush.msra.mxu0 0.0
      %333 = vmatpush.msra.mxu0 0.0
      %334 = vmatpush.msra.mxu0 0.0
      %335 = vmatpush.msra.mxu0 %v316
      %336 = vmatmul.f32.gmra.mxu0 %v313
      %v337 = vpop.f32.mrf.mxu0
      %v338 = vadd.f32 %v305, %v337
      %339 = vdwg.mxu0
      %340 = vmatpush.msra.mxu0 0.0
      %341 = vmatpush.msra.mxu0 0.0
      %342 = vmatpush.msra.mxu0 0.0
      %343 = vmatpush.msra.mxu0 0.0
      %344 = vmatpush.msra.mxu0 0.0
      %345 = vmatpush.msra.mxu0 0.0
      %346 = vmatpush.msra.mxu0 0.0
      %347 = vmatpush.msra.mxu0 0.0
      %348 = vmatpush.msra.mxu0 0.0
      %349 = vmatpush.msra.mxu0 0.0
      %350 = vmatpush.msra.mxu0 0.0
      %351 = vmatpush.msra.mxu0 0.0
      %352 = vmatpush.msra.mxu0 0.0
      %353 = vmatpush.msra.mxu0 0.0
      %354 = vmatpush.msra.mxu0 0.0
      %355 = vmatpush.msra.mxu0 %v318
      %356 = vmatmul.f32.gmra.mxu0 %v313
      %v357 = vpop.f32.mrf.mxu0
      %v358 = vadd.f32 %v305, %v357
      %359 = vdwg.mxu0
      %vm360 = vcmp.gt.f32.partialorder %v338, 0.0
      %vm361 = vcmp.gt.f32.partialorder %v358, 0.0
      %362 = vset.pattern.permute.xlu0 1
      %363 = vperm.xlu0 %362, %v296
      %v364 = vpop.permute.xlu0 %363
      %v366 = vmul.f32 %v364, %v338
      %v367 = vmul.f32 %v364, %v358
      %v368 = vsel %vm360, %v338, %v366
      %v369 = vsel %vm361, %v358, %v367
      %v370 = vld [vmem:[%s290] sm:$0xf]
      %v371 = vld [vmem:[%s2] sm:$0xff]
      %v372 = vld [vmem:[%s2 + $0x8] sm:$0xff]
      %v373 = vld [vmem:[%s2 + $0x10] sm:$0xff]
      %v374 = vld [vmem:[%s2 + $0x18] sm:$0xff]
      %v375 = vld [vmem:[%s2 + $0x20] sm:$0xff]
      %v376 = vld [vmem:[%s2 + $0x28] sm:$0xff]
      %v377 = vld [vmem:[%s2 + $0x30] sm:$0xff]
      %v378 = vld [vmem:[%s2 + $0x38] sm:$0xff]
      %v379 = vld [vmem:[%s2 + $0x40] sm:$0xff]
      %v380 = vld [vmem:[%s2 + $0x48] sm:$0xff]
      %v381 = vld [vmem:[%s2 + $0x50] sm:$0xff]
      %v382 = vld [vmem:[%s2 + $0x58] sm:$0xff]
      %v383 = vld [vmem:[%s2 + $0x60] sm:$0xff]
      %v384 = vld [vmem:[%s2 + $0x68] sm:$0xff]
      %v385 = vld [vmem:[%s2 + $0x70] sm:$0xff]
      %v386 = vld [vmem:[%s2 + $0x78] sm:$0xff]
      %vm387 = vcmask 523264
      %v389 = vsel %vm387, %v370, 0
      %391 = vmatpush.msra.mxu0 0.0
      %392 = vmatpush.msra.mxu0 0.0
      %393 = vmatpush.msra.mxu0 0.0
      %394 = vmatpush.msra.mxu0 0.0
      %395 = vmatpush.msra.mxu0 0.0
      %396 = vmatpush.msra.mxu0 0.0
      %397 = vmatpush.msra.mxu0 0.0
      %398 = vmatpush.msra.mxu0 0.0
      %399 = vmatpush.msra.mxu0 %v385
      %400 = vmatpush.msra.mxu0 %v383
      %401 = vmatpush.msra.mxu0 %v381
      %402 = vmatpush.msra.mxu0 %v379
      %403 = vmatpush.msra.mxu0 %v377
      %404 = vmatpush.msra.mxu0 %v375
      %405 = vmatpush.msra.mxu0 %v373
      %406 = vmatpush.msra.mxu0 %v371
      %407 = vmatmul.f32.gmra.mxu0 %v389
      %v408 = vpop.f32.mrf.mxu0
      %v409 = vadd.f32 0.0, %v408
      %410 = vdwg.mxu0
      %411 = vmatpush.msra.mxu0 0.0
      %412 = vmatpush.msra.mxu0 0.0
      %413 = vmatpush.msra.mxu0 0.0
      %414 = vmatpush.msra.mxu0 0.0
      %415 = vmatpush.msra.mxu0 0.0
      %416 = vmatpush.msra.mxu0 0.0
      %417 = vmatpush.msra.mxu0 0.0
      %418 = vmatpush.msra.mxu0 0.0
      %419 = vmatpush.msra.mxu0 %v386
      %420 = vmatpush.msra.mxu0 %v384
      %421 = vmatpush.msra.mxu0 %v382
      %422 = vmatpush.msra.mxu0 %v380
      %423 = vmatpush.msra.mxu0 %v378
      %424 = vmatpush.msra.mxu0 %v376
      %425 = vmatpush.msra.mxu0 %v374
      %426 = vmatpush.msra.mxu0 %v372
      %427 = vmatmul.f32.gmra.mxu0 %v389
      %v428 = vpop.f32.mrf.mxu0
      %v429 = vadd.f32 0.0, %v428
      %430 = vdwg.mxu0
      %v431 = vlaneseq
      %v432 = vand.u32 %v431, 127
      %v433 = vadd.s32 %v432, 128
      %vm434 = vcmp.lt.s32.totalorder %v432, 0
      %v435 = vsub.s32 0, %v432
      %v436 = vsel %vm434, %v435, %v432
      %v437 = vshrl.u32 %v436, 4
      %v438 = vand.u32 %v436, 15
      %v439 = vsub.s32 0, %v438
      %v440 = vsel %vm434, %v439, %v438
      %vm441 = vcmp.lt.s32.totalorder %v433, 0
      %v442 = vsub.s32 0, %v433
      %v443 = vsel %vm441, %v442, %v433
      %v444 = vshrl.u32 %v443, 4
      %v445 = vand.u32 %v443, 15
      %v446 = vsub.s32 0, %v445
      %v447 = vsel %vm441, %v446, %v445
      %vm448 = vcmp.ne.s32.totalorder %v440, 0
      %vm449 = vcmp.ne.s32.totalorder %v447, 0
      %vm450 = vcmp.lt.s32.totalorder %v440, 0
      %vm451 = vcmp.lt.s32.totalorder %v447, 0
      %vm452 = vmand %vm450, %vm448
      %vm453 = vmand %vm451, %vm449
      %v454 = vadd.s32 %v440, 16
      %v455 = vadd.s32 %v447, 16
      %v456 = vsel %vm452, %v454, %v440
      %v457 = vsel %vm453, %v455, %v447
      %vm458 = vcmp.ne.s32.totalorder %v456, 0
      %vm459 = vcmp.ne.s32.totalorder %v457, 0
      %vm460 = vcmp.ne.s32.totalorder %v456, 15
      %vm461 = vcmp.ne.s32.totalorder %v457, 15
      %462 = vst [vmem:[#allocation2] sm:$0xff] 0.0
      %vm463 = vcmask 388096
      %464 = vst.msk [vmem:[#allocation2 + $0x8] sm:$0xf] %vm463, 0.0
      %v467 = vrot.slane %v429, 4
      %v468 = vsel %vm315, %v409, %v467
      %469 = vrot.lane.b32.xlu0 %v468, 24
      %v470 = vpop.permute.xlu0 %469
      %v471 = vrot.slane %v470, 4
      %vm472 = vcmask 195584
      %v473 = vsel %vm472, %v471, %v470
      %vm476 = vcmask 1043648
      %vm477 = vcmask 1047556
      %vm478 = vmor %vm477, %vm476
      %479 = vst.msk [vmem:[#allocation2] sm:$0xff] %vm478, %v473
      %vm480 = vcmask 191488
      %481 = vst.msk [vmem:[#allocation2 + $0x8] sm:$0xf] %vm480, %v471
      %v482 = vld [vmem:[%s4] sm:$0xf]
      %v483 = vld [vmem:[#allocation2] sm:$0xff]
      %v484 = vld [vmem:[#allocation2 + $0x8] sm:$0xf]
      %v485 = vsel %vm458, 1, 0
      %v486 = vsel %vm459, 1, 0
      %vm487 = vcmp.eq.s32.totalorder %v485, 1
      %vm488 = vcmp.eq.s32.totalorder %v486, 1
      %491 = vst [vmem:[#allocation1] ss:$2 sm:$0xff] %v483
      %s492 = scalar_lea.vmem [#allocation1], 16
      %493 = vst [vmem:[%s492] ss:$2 sm:$0xff] %v484
      %v494 = vld.sshfl [vmem:[#allocation1] sm:$0xff pattern:$0x75316420]
      %v495 = vld.sshfl [vmem:[#allocation1 + $0x8] sm:$0xff pattern:$0x75316420]
      %v496 = vld.sshfl [vmem:[#allocation1 + $0x10] sm:$0xff pattern:$0x75316420]
      %497 = vrot.lane.b32.xlu0 %v494, 121
      %v498 = vpop.permute.xlu0 %497
      %499 = vrot.lane.b32.xlu0 %v495, 121
      %v500 = vpop.permute.xlu0 %499
      %501 = vrot.lane.b32.xlu0 %v496, 121
      %v502 = vpop.permute.xlu0 %501
      %vm503 = vcmask 990208
      %v504 = vsel %vm503, %v498, %v500
      %v505 = vsel %vm503, %v500, %v502
      %v508 = vsel %vm487, %v504, 0.0
      %v509 = vsel %vm488, %v505, 0.0
      %v510 = vld [vmem:[%s4] sm:$0xf]
      %v511 = vld [vmem:[#allocation2] sm:$0xff]
      %v512 = vld [vmem:[#allocation2 + $0x8] sm:$0xf]
      %514 = vrot.lane.b32.xlu0 %v510, 124
      %v515 = vpop.permute.xlu0 %514
      %518 = vst [vmem:[#allocation1] ss:$2 sm:$0xff] %v511
      %s519 = scalar_lea.vmem [#allocation1], 16
      %520 = vst [vmem:[%s519] ss:$2 sm:$0xff] %v512
      %v521 = vld.sshfl [vmem:[#allocation1] sm:$0xff pattern:$0x75316420]
      %v522 = vld.sshfl [vmem:[#allocation1 + $0x8] sm:$0xff pattern:$0x75316420]
      %v523 = vld.sshfl [vmem:[#allocation1 + $0x10] sm:$0xff pattern:$0x75316420]
      %524 = vrot.lane.b32.xlu0 %v521, 120
      %v525 = vpop.permute.xlu0 %524
      %526 = vrot.lane.b32.xlu0 %v522, 120
      %v527 = vpop.permute.xlu0 %526
      %528 = vrot.lane.b32.xlu0 %v523, 120
      %v529 = vpop.permute.xlu0 %528
      %vm530 = vcmask 982016
      %v531 = vsel %vm530, %v525, %v527
      %v532 = vsel %vm530, %v527, %v529
      %v533 = vsel %vm311, %v515, 0
      %v535 = vsel %vm315, %v531, 0
      %v537 = vsel %vm315, %v532, 0
      %539 = vmatpush.msra.mxu0 0.0
      %540 = vmatpush.msra.mxu0 0.0
      %541 = vmatpush.msra.mxu0 0.0
      %542 = vmatpush.msra.mxu0 0.0
      %543 = vmatpush.msra.mxu0 0.0
      %544 = vmatpush.msra.mxu0 0.0
      %545 = vmatpush.msra.mxu0 0.0
      %546 = vmatpush.msra.mxu0 0.0
      %547 = vmatpush.msra.mxu0 0.0
      %548 = vmatpush.msra.mxu0 0.0
      %549 = vmatpush.msra.mxu0 0.0
      %550 = vmatpush.msra.mxu0 0.0
      %551 = vmatpush.msra.mxu0 0.0
      %552 = vmatpush.msra.mxu0 0.0
      %553 = vmatpush.msra.mxu0 0.0
      %554 = vmatpush.msra.mxu0 %v535
      %555 = vmatmul.f32.gmra.mxu0 %v533
      %v556 = vpop.f32.mrf.mxu0
      %v557 = vadd.f32 0.0, %v556
      %558 = vdwg.mxu0
      %559 = vmatpush.msra.mxu0 0.0
      %560 = vmatpush.msra.mxu0 0.0
      %561 = vmatpush.msra.mxu0 0.0
      %562 = vmatpush.msra.mxu0 0.0
      %563 = vmatpush.msra.mxu0 0.0
      %564 = vmatpush.msra.mxu0 0.0
      %565 = vmatpush.msra.mxu0 0.0
      %566 = vmatpush.msra.mxu0 0.0
      %567 = vmatpush.msra.mxu0 0.0
      %568 = vmatpush.msra.mxu0 0.0
      %569 = vmatpush.msra.mxu0 0.0
      %570 = vmatpush.msra.mxu0 0.0
      %571 = vmatpush.msra.mxu0 0.0
      %572 = vmatpush.msra.mxu0 0.0
      %573 = vmatpush.msra.mxu0 0.0
      %574 = vmatpush.msra.mxu0 %v537
      %575 = vmatmul.f32.gmra.mxu0 %v533
      %v576 = vpop.f32.mrf.mxu0
      %v577 = vadd.f32 0.0, %v576
      %578 = vdwg.mxu0
      %v580 = vsel %vm311, %v482, 0
      %v583 = vsel %vm315, %v508, 0
      %v586 = vsel %vm315, %v509, 0
      %588 = vmatpush.msra.mxu0 0.0
      %589 = vmatpush.msra.mxu0 0.0
      %590 = vmatpush.msra.mxu0 0.0
      %591 = vmatpush.msra.mxu0 0.0
      %592 = vmatpush.msra.mxu0 0.0
      %593 = vmatpush.msra.mxu0 0.0
      %594 = vmatpush.msra.mxu0 0.0
      %595 = vmatpush.msra.mxu0 0.0
      %596 = vmatpush.msra.mxu0 0.0
      %597 = vmatpush.msra.mxu0 0.0
      %598 = vmatpush.msra.mxu0 0.0
      %599 = vmatpush.msra.mxu0 0.0
      %600 = vmatpush.msra.mxu0 0.0
      %601 = vmatpush.msra.mxu0 0.0
      %602 = vmatpush.msra.mxu0 0.0
      %603 = vmatpush.msra.mxu0 %v583
      %604 = vmatmul.f32.gmra.mxu0 %v580
      %v605 = vpop.f32.mrf.mxu0
      %v606 = vadd.f32 %v557, %v605
      %607 = vdwg.mxu0
      %608 = vmatpush.msra.mxu0 0.0
      %609 = vmatpush.msra.mxu0 0.0
      %610 = vmatpush.msra.mxu0 0.0
      %611 = vmatpush.msra.mxu0 0.0
      %612 = vmatpush.msra.mxu0 0.0
      %613 = vmatpush.msra.mxu0 0.0
      %614 = vmatpush.msra.mxu0 0.0
      %615 = vmatpush.msra.mxu0 0.0
      %616 = vmatpush.msra.mxu0 0.0
      %617 = vmatpush.msra.mxu0 0.0
      %618 = vmatpush.msra.mxu0 0.0
      %619 = vmatpush.msra.mxu0 0.0
      %620 = vmatpush.msra.mxu0 0.0
      %621 = vmatpush.msra.mxu0 0.0
      %622 = vmatpush.msra.mxu0 0.0
      %623 = vmatpush.msra.mxu0 %v586
      %624 = vmatmul.f32.gmra.mxu0 %v580
      %v625 = vpop.f32.mrf.mxu0
      %v626 = vadd.f32 %v577, %v625
      %627 = vdwg.mxu0
      %v628 = vld [vmem:[%s4] sm:$0xf]
      %v629 = vld [vmem:[#allocation2] sm:$0xff]
      %v630 = vld [vmem:[#allocation2 + $0x8] sm:$0xf]
      %v631 = vsel %vm460, 1, 0
      %v632 = vsel %vm461, 1, 0
      %vm633 = vcmp.eq.s32.totalorder %v631, 1
      %vm634 = vcmp.eq.s32.totalorder %v632, 1
      %637 = vst [vmem:[#allocation1] ss:$2 sm:$0xff] %v629
      %s638 = scalar_lea.vmem [#allocation1], 16
      %639 = vst [vmem:[%s638] ss:$2 sm:$0xff] %v630
      %v640 = vld.sshfl [vmem:[#allocation1] sm:$0xff pattern:$0x75316420]
      %v641 = vld.sshfl [vmem:[#allocation1 + $0x8] sm:$0xff pattern:$0x75316420]
      %v642 = vld.sshfl [vmem:[#allocation1 + $0x10] sm:$0xff pattern:$0x75316420]
      %643 = vrot.lane.b32.xlu0 %v640, 119
      %v644 = vpop.permute.xlu0 %643
      %645 = vrot.lane.b32.xlu0 %v641, 119
      %v646 = vpop.permute.xlu0 %645
      %647 = vrot.lane.b32.xlu0 %v642, 119
      %v648 = vpop.permute.xlu0 %647
      %vm649 = vcmask 973824
      %v650 = vsel %vm649, %v644, %v646
      %v651 = vsel %vm649, %v646, %v648
      %v654 = vsel %vm633, %v650, 0.0
      %v655 = vsel %vm634, %v651, 0.0
      %657 = vrot.lane.b32.xlu0 %v628, 120
      %v658 = vpop.permute.xlu0 %657
      %v659 = vsel %vm311, %v658, 0
      %v662 = vsel %vm315, %v654, 0
      %v665 = vsel %vm315, %v655, 0
      %667 = vmatpush.msra.mxu0 0.0
      %668 = vmatpush.msra.mxu0 0.0
      %669 = vmatpush.msra.mxu0 0.0
      %670 = vmatpush.msra.mxu0 0.0
      %671 = vmatpush.msra.mxu0 0.0
      %672 = vmatpush.msra.mxu0 0.0
      %673 = vmatpush.msra.mxu0 0.0
      %674 = vmatpush.msra.mxu0 0.0
      %675 = vmatpush.msra.mxu0 0.0
      %676 = vmatpush.msra.mxu0 0.0
      %677 = vmatpush.msra.mxu0 0.0
      %678 = vmatpush.msra.mxu0 0.0
      %679 = vmatpush.msra.mxu0 0.0
      %680 = vmatpush.msra.mxu0 0.0
      %681 = vmatpush.msra.mxu0 0.0
      %682 = vmatpush.msra.mxu0 %v662
      %683 = vmatmul.f32.gmra.mxu0 %v659
      %v684 = vpop.f32.mrf.mxu0
      %v685 = vadd.f32 0.0, %v684
      %686 = vdwg.mxu0
      %687 = vmatpush.msra.mxu0 0.0
      %688 = vmatpush.msra.mxu0 0.0
      %689 = vmatpush.msra.mxu0 0.0
      %690 = vmatpush.msra.mxu0 0.0
      %691 = vmatpush.msra.mxu0 0.0
      %692 = vmatpush.msra.mxu0 0.0
      %693 = vmatpush.msra.mxu0 0.0
      %694 = vmatpush.msra.mxu0 0.0
      %695 = vmatpush.msra.mxu0 0.0
      %696 = vmatpush.msra.mxu0 0.0
      %697 = vmatpush.msra.mxu0 0.0
      %698 = vmatpush.msra.mxu0 0.0
      %699 = vmatpush.msra.mxu0 0.0
      %700 = vmatpush.msra.mxu0 0.0
      %701 = vmatpush.msra.mxu0 0.0
      %702 = vmatpush.msra.mxu0 %v665
      %703 = vmatmul.f32.gmra.mxu0 %v659
      %v704 = vpop.f32.mrf.mxu0
      %v705 = vadd.f32 0.0, %v704
      %706 = vdwg.mxu0
      %v707 = vadd.f32 %v606, %v685
      %v708 = vadd.f32 %v626, %v705
      %v709 = vld [vmem:[%s4] sm:$0xf]
      %v710 = vld [vmem:[#allocation2] sm:$0xff]
      %v711 = vld [vmem:[#allocation2 + $0x8] sm:$0xf]
      %714 = vst [vmem:[#allocation1] ss:$2 sm:$0xff] %v710
      %s715 = scalar_lea.vmem [#allocation1], 16
      %716 = vst [vmem:[%s715] ss:$2 sm:$0xff] %v711
      %v717 = vld.sshfl [vmem:[#allocation1] sm:$0xff pattern:$0x75316420]
      %v718 = vld.sshfl [vmem:[#allocation1 + $0x8] sm:$0xff pattern:$0x75316420]
      %v719 = vld.sshfl [vmem:[#allocation1 + $0x10] sm:$0xff pattern:$0x75316420]
      %720 = vrot.lane.b32.xlu0 %v717, 105
      %v721 = vpop.permute.xlu0 %720
      %722 = vrot.lane.b32.xlu0 %v718, 105
      %v723 = vpop.permute.xlu0 %722
      %724 = vrot.lane.b32.xlu0 %v719, 105
      %v725 = vpop.permute.xlu0 %724
      %vm726 = vcmask 859136
      %v727 = vsel %vm726, %v721, %v723
      %v728 = vsel %vm726, %v723, %v725
      %v731 = vsel %vm487, %v727, 0.0
      %v732 = vsel %vm488, %v728, 0.0
      %734 = vrot.lane.b32.xlu0 %v709, 116
      %v735 = vpop.permute.xlu0 %734
      %v736 = vsel %vm311, %v735, 0
      %v739 = vsel %vm315, %v731, 0
      %v742 = vsel %vm315, %v732, 0
      %744 = vmatpush.msra.mxu0 0.0
      %745 = vmatpush.msra.mxu0 0.0
      %746 = vmatpush.msra.mxu0 0.0
      %747 = vmatpush.msra.mxu0 0.0
      %748 = vmatpush.msra.mxu0 0.0
      %749 = vmatpush.msra.mxu0 0.0
      %750 = vmatpush.msra.mxu0 0.0
      %751 = vmatpush.msra.mxu0 0.0
      %752 = vmatpush.msra.mxu0 0.0
      %753 = vmatpush.msra.mxu0 0.0
      %754 = vmatpush.msra.mxu0 0.0
      %755 = vmatpush.msra.mxu0 0.0
      %756 = vmatpush.msra.mxu0 0.0
      %757 = vmatpush.msra.mxu0 0.0
      %758 = vmatpush.msra.mxu0 0.0
      %759 = vmatpush.msra.mxu0 %v739
      %760 = vmatmul.f32.gmra.mxu0 %v736
      %v761 = vpop.f32.mrf.mxu0
      %v762 = vadd.f32 0.0, %v761
      %763 = vdwg.mxu0
      %764 = vmatpush.msra.mxu0 0.0
      %765 = vmatpush.msra.mxu0 0.0
      %766 = vmatpush.msra.mxu0 0.0
      %767 = vmatpush.msra.mxu0 0.0
      %768 = vmatpush.msra.mxu0 0.0
      %769 = vmatpush.msra.mxu0 0.0
      %770 = vmatpush.msra.mxu0 0.0
      %771 = vmatpush.msra.mxu0 0.0
      %772 = vmatpush.msra.mxu0 0.0
      %773 = vmatpush.msra.mxu0 0.0
      %774 = vmatpush.msra.mxu0 0.0
      %775 = vmatpush.msra.mxu0 0.0
      %776 = vmatpush.msra.mxu0 0.0
      %777 = vmatpush.msra.mxu0 0.0
      %778 = vmatpush.msra.mxu0 0.0
      %779 = vmatpush.msra.mxu0 %v742
      %780 = vmatmul.f32.gmra.mxu0 %v736
      %v781 = vpop.f32.mrf.mxu0
      %v782 = vadd.f32 0.0, %v781
      %783 = vdwg.mxu0
      %v784 = vadd.f32 %v707, %v762
      %v785 = vadd.f32 %v708, %v782
      %v786 = vld [vmem:[%s4] sm:$0xf]
      %v787 = vld [vmem:[#allocation2] sm:$0xff]
      %v788 = vld [vmem:[#allocation2 + $0x8] sm:$0xf]
      %790 = vrot.lane.b32.xlu0 %v786, 112
      %v791 = vpop.permute.xlu0 %790
      %794 = vst [vmem:[#allocation1] ss:$2 sm:$0xff] %v787
      %s795 = scalar_lea.vmem [#allocation1], 16
      %796 = vst [vmem:[%s795] ss:$2 sm:$0xff] %v788
      %v797 = vld.sshfl [vmem:[#allocation1] sm:$0xff pattern:$0x75316420]
      %v798 = vld.sshfl [vmem:[#allocation1 + $0x8] sm:$0xff pattern:$0x75316420]
      %v799 = vld.sshfl [vmem:[#allocation1 + $0x10] sm:$0xff pattern:$0x75316420]
      %800 = vrot.lane.b32.xlu0 %v797, 104
      %v801 = vpop.permute.xlu0 %800
      %802 = vrot.lane.b32.xlu0 %v798, 104
      %v803 = vpop.permute.xlu0 %802
      %804 = vrot.lane.b32.xlu0 %v799, 104
      %v805 = vpop.permute.xlu0 %804
      %vm806 = vcmask 850944
      %v807 = vsel %vm806, %v801, %v803
      %v808 = vsel %vm806, %v803, %v805
      %v809 = vsel %vm311, %v791, 0
      %v811 = vsel %vm315, %v807, 0
      %v813 = vsel %vm315, %v808, 0
      %815 = vmatpush.msra.mxu0 0.0
      %816 = vmatpush.msra.mxu0 0.0
      %817 = vmatpush.msra.mxu0 0.0
      %818 = vmatpush.msra.mxu0 0.0
      %819 = vmatpush.msra.mxu0 0.0
      %820 = vmatpush.msra.mxu0 0.0
      %821 = vmatpush.msra.mxu0 0.0
      %822 = vmatpush.msra.mxu0 0.0
      %823 = vmatpush.msra.mxu0 0.0
      %824 = vmatpush.msra.mxu0 0.0
      %825 = vmatpush.msra.mxu0 0.0
      %826 = vmatpush.msra.mxu0 0.0
      %827 = vmatpush.msra.mxu0 0.0
      %828 = vmatpush.msra.mxu0 0.0
      %829 = vmatpush.msra.mxu0 0.0
      %830 = vmatpush.msra.mxu0 %v811
      %831 = vmatmul.f32.gmra.mxu0 %v809
      %v832 = vpop.f32.mrf.mxu0
      %v833 = vadd.f32 0.0, %v832
      %834 = vdwg.mxu0
      %835 = vmatpush.msra.mxu0 0.0
      %836 = vmatpush.msra.mxu0 0.0
      %837 = vmatpush.msra.mxu0 0.0
      %838 = vmatpush.msra.mxu0 0.0
      %839 = vmatpush.msra.mxu0 0.0
      %840 = vmatpush.msra.mxu0 0.0
      %841 = vmatpush.msra.mxu0 0.0
      %842 = vmatpush.msra.mxu0 0.0
      %843 = vmatpush.msra.mxu0 0.0
      %844 = vmatpush.msra.mxu0 0.0
      %845 = vmatpush.msra.mxu0 0.0
      %846 = vmatpush.msra.mxu0 0.0
      %847 = vmatpush.msra.mxu0 0.0
      %848 = vmatpush.msra.mxu0 0.0
      %849 = vmatpush.msra.mxu0 0.0
      %850 = vmatpush.msra.mxu0 %v813
      %851 = vmatmul.f32.gmra.mxu0 %v809
      %v852 = vpop.f32.mrf.mxu0
      %v853 = vadd.f32 0.0, %v852
      %854 = vdwg.mxu0
      %v855 = vadd.f32 %v784, %v833
      %v856 = vadd.f32 %v785, %v853
      %v857 = vld [vmem:[%s4] sm:$0xf]
      %v858 = vld [vmem:[#allocation2] sm:$0xff]
      %v859 = vld [vmem:[#allocation2 + $0x8] sm:$0xf]
      %862 = vst [vmem:[#allocation1] ss:$2 sm:$0xff] %v858
      %s863 = scalar_lea.vmem [#allocation1], 16
      %864 = vst [vmem:[%s863] ss:$2 sm:$0xff] %v859
      %v865 = vld.sshfl [vmem:[#allocation1] sm:$0xff pattern:$0x75316420]
      %v866 = vld.sshfl [vmem:[#allocation1 + $0x8] sm:$0xff pattern:$0x75316420]
      %v867 = vld.sshfl [vmem:[#allocation1 + $0x10] sm:$0xff pattern:$0x75316420]
      %868 = vrot.lane.b32.xlu0 %v865, 103
      %v869 = vpop.permute.xlu0 %868
      %870 = vrot.lane.b32.xlu0 %v866, 103
      %v871 = vpop.permute.xlu0 %870
      %872 = vrot.lane.b32.xlu0 %v867, 103
      %v873 = vpop.permute.xlu0 %872
      %vm874 = vcmask 842752
      %v875 = vsel %vm874, %v869, %v871
      %v876 = vsel %vm874, %v871, %v873
      %v879 = vsel %vm633, %v875, 0.0
      %v880 = vsel %vm634, %v876, 0.0
      %882 = vrot.lane.b32.xlu0 %v857, 108
      %v883 = vpop.permute.xlu0 %882
      %v884 = vsel %vm311, %v883, 0
      %v887 = vsel %vm315, %v879, 0
      %v890 = vsel %vm315, %v880, 0
      %892 = vmatpush.msra.mxu0 0.0
      %893 = vmatpush.msra.mxu0 0.0
      %894 = vmatpush.msra.mxu0 0.0
      %895 = vmatpush.msra.mxu0 0.0
      %896 = vmatpush.msra.mxu0 0.0
      %897 = vmatpush.msra.mxu0 0.0
      %898 = vmatpush.msra.mxu0 0.0
      %899 = vmatpush.msra.mxu0 0.0
      %900 = vmatpush.msra.mxu0 0.0
      %901 = vmatpush.msra.mxu0 0.0
      %902 = vmatpush.msra.mxu0 0.0
      %903 = vmatpush.msra.mxu0 0.0
      %904 = vmatpush.msra.mxu0 0.0
      %905 = vmatpush.msra.mxu0 0.0
      %906 = vmatpush.msra.mxu0 0.0
      %907 = vmatpush.msra.mxu0 %v887
      %908 = vmatmul.f32.gmra.mxu0 %v884
      %v909 = vpop.f32.mrf.mxu0
      %v910 = vadd.f32 0.0, %v909
      %911 = vdwg.mxu0
      %912 = vmatpush.msra.mxu0 0.0
      %913 = vmatpush.msra.mxu0 0.0
      %914 = vmatpush.msra.mxu0 0.0
      %915 = vmatpush.msra.mxu0 0.0
      %916 = vmatpush.msra.mxu0 0.0
      %917 = vmatpush.msra.mxu0 0.0
      %918 = vmatpush.msra.mxu0 0.0
      %919 = vmatpush.msra.mxu0 0.0
      %920 = vmatpush.msra.mxu0 0.0
      %921 = vmatpush.msra.mxu0 0.0
      %922 = vmatpush.msra.mxu0 0.0
      %923 = vmatpush.msra.mxu0 0.0
      %924 = vmatpush.msra.mxu0 0.0
      %925 = vmatpush.msra.mxu0 0.0
      %926 = vmatpush.msra.mxu0 0.0
      %927 = vmatpush.msra.mxu0 %v890
      %928 = vmatmul.f32.gmra.mxu0 %v884
      %v929 = vpop.f32.mrf.mxu0
      %v930 = vadd.f32 0.0, %v929
      %931 = vdwg.mxu0
      %v932 = vadd.f32 %v855, %v910
      %v933 = vadd.f32 %v856, %v930
      %v934 = vld [vmem:[%s4] sm:$0xf]
      %v935 = vld [vmem:[#allocation2] sm:$0xff]
      %v936 = vld [vmem:[#allocation2 + $0x8] sm:$0xf]
      %939 = vst [vmem:[#allocation1] ss:$2 sm:$0xff] %v935
      %s940 = scalar_lea.vmem [#allocation1], 16
      %941 = vst [vmem:[%s940] ss:$2 sm:$0xff] %v936
      %v942 = vld.sshfl [vmem:[#allocation1] sm:$0xff pattern:$0x75316420]
      %v943 = vld.sshfl [vmem:[#allocation1 + $0x8] sm:$0xff pattern:$0x75316420]
      %v944 = vld.sshfl [vmem:[#allocation1 + $0x10] sm:$0xff pattern:$0x75316420]
      %945 = vrot.lane.b32.xlu0 %v942, 89
      %v946 = vpop.permute.xlu0 %945
      %947 = vrot.lane.b32.xlu0 %v943, 89
      %v948 = vpop.permute.xlu0 %947
      %949 = vrot.lane.b32.xlu0 %v944, 89
      %v950 = vpop.permute.xlu0 %949
      %vm951 = vcmask 728064
      %v952 = vsel %vm951, %v946, %v948
      %v953 = vsel %vm951, %v948, %v950
      %v956 = vsel %vm487, %v952, 0.0
      %v957 = vsel %vm488, %v953, 0.0
      %959 = vrot.lane.b32.xlu0 %v934, 104
      %v960 = vpop.permute.xlu0 %959
      %v961 = vsel %vm311, %v960, 0
      %v964 = vsel %vm315, %v956, 0
      %v967 = vsel %vm315, %v957, 0
      %969 = vmatpush.msra.mxu0 0.0
      %970 = vmatpush.msra.mxu0 0.0
      %971 = vmatpush.msra.mxu0 0.0
      %972 = vmatpush.msra.mxu0 0.0
      %973 = vmatpush.msra.mxu0 0.0
      %974 = vmatpush.msra.mxu0 0.0
      %975 = vmatpush.msra.mxu0 0.0
      %976 = vmatpush.msra.mxu0 0.0
      %977 = vmatpush.msra.mxu0 0.0
      %978 = vmatpush.msra.mxu0 0.0
      %979 = vmatpush.msra.mxu0 0.0
      %980 = vmatpush.msra.mxu0 0.0
      %981 = vmatpush.msra.mxu0 0.0
      %982 = vmatpush.msra.mxu0 0.0
      %983 = vmatpush.msra.mxu0 0.0
      %984 = vmatpush.msra.mxu0 %v964
      %985 = vmatmul.f32.gmra.mxu0 %v961
      %v986 = vpop.f32.mrf.mxu0
      %v987 = vadd.f32 0.0, %v986
      %988 = vdwg.mxu0
      %989 = vmatpush.msra.mxu0 0.0
      %990 = vmatpush.msra.mxu0 0.0
      %991 = vmatpush.msra.mxu0 0.0
      %992 = vmatpush.msra.mxu0 0.0
      %993 = vmatpush.msra.mxu0 0.0
      %994 = vmatpush.msra.mxu0 0.0
      %995 = vmatpush.msra.mxu0 0.0
      %996 = vmatpush.msra.mxu0 0.0
      %997 = vmatpush.msra.mxu0 0.0
      %998 = vmatpush.msra.mxu0 0.0
      %999 = vmatpush.msra.mxu0 0.0
      %1000 = vmatpush.msra.mxu0 0.0
      %1001 = vmatpush.msra.mxu0 0.0
      %1002 = vmatpush.msra.mxu0 0.0
      %1003 = vmatpush.msra.mxu0 0.0
      %1004 = vmatpush.msra.mxu0 %v967
      %1005 = vmatmul.f32.gmra.mxu0 %v961
      %v1006 = vpop.f32.mrf.mxu0
      %v1007 = vadd.f32 0.0, %v1006
      %1008 = vdwg.mxu0
      %v1009 = vadd.f32 %v932, %v987
      %v1010 = vadd.f32 %v933, %v1007
      %v1011 = vld [vmem:[%s4] sm:$0xf]
      %v1012 = vld [vmem:[#allocation2] sm:$0xff]
      %v1013 = vld [vmem:[#allocation2 + $0x8] sm:$0xf]
      %1015 = vrot.lane.b32.xlu0 %v1011, 100
      %v1016 = vpop.permute.xlu0 %1015
      %1019 = vst [vmem:[#allocation1] ss:$2 sm:$0xff] %v1012
      %s1020 = scalar_lea.vmem [#allocation1], 16
      %1021 = vst [vmem:[%s1020] ss:$2 sm:$0xff] %v1013
      %v1022 = vld.sshfl [vmem:[#allocation1] sm:$0xff pattern:$0x75316420]
      %v1023 = vld.sshfl [vmem:[#allocation1 + $0x8] sm:$0xff pattern:$0x75316420]
      %v1024 = vld.sshfl [vmem:[#allocation1 + $0x10] sm:$0xff pattern:$0x75316420]
      %1025 = vrot.lane.b32.xlu0 %v1022, 88
      %v1026 = vpop.permute.xlu0 %1025
      %1027 = vrot.lane.b32.xlu0 %v1023, 88
      %v1028 = vpop.permute.xlu0 %1027
      %1029 = vrot.lane.b32.xlu0 %v1024, 88
      %v1030 = vpop.permute.xlu0 %1029
      %vm1031 = vcmask 719872
      %v1032 = vsel %vm1031, %v1026, %v1028
      %v1033 = vsel %vm1031, %v1028, %v1030
      %v1034 = vsel %vm311, %v1016, 0
      %v1036 = vsel %vm315, %v1032, 0
      %v1038 = vsel %vm315, %v1033, 0
      %1040 = vmatpush.msra.mxu0 0.0
      %1041 = vmatpush.msra.mxu0 0.0
      %1042 = vmatpush.msra.mxu0 0.0
      %1043 = vmatpush.msra.mxu0 0.0
      %1044 = vmatpush.msra.mxu0 0.0
      %1045 = vmatpush.msra.mxu0 0.0
      %1046 = vmatpush.msra.mxu0 0.0
      %1047 = vmatpush.msra.mxu0 0.0
      %1048 = vmatpush.msra.mxu0 0.0
      %1049 = vmatpush.msra.mxu0 0.0
      %1050 = vmatpush.msra.mxu0 0.0
      %1051 = vmatpush.msra.mxu0 0.0
      %1052 = vmatpush.msra.mxu0 0.0
      %1053 = vmatpush.msra.mxu0 0.0
      %1054 = vmatpush.msra.mxu0 0.0
      %1055 = vmatpush.msra.mxu0 %v1036
      %1056 = vmatmul.f32.gmra.mxu0 %v1034
      %v1057 = vpop.f32.mrf.mxu0
      %v1058 = vadd.f32 0.0, %v1057
      %1059 = vdwg.mxu0
      %1060 = vmatpush.msra.mxu0 0.0
      %1061 = vmatpush.msra.mxu0 0.0
      %1062 = vmatpush.msra.mxu0 0.0
      %1063 = vmatpush.msra.mxu0 0.0
      %1064 = vmatpush.msra.mxu0 0.0
      %1065 = vmatpush.msra.mxu0 0.0
      %1066 = vmatpush.msra.mxu0 0.0
      %1067 = vmatpush.msra.mxu0 0.0
      %1068 = vmatpush.msra.mxu0 0.0
      %1069 = vmatpush.msra.mxu0 0.0
      %1070 = vmatpush.msra.mxu0 0.0
      %1071 = vmatpush.msra.mxu0 0.0
      %1072 = vmatpush.msra.mxu0 0.0
      %1073 = vmatpush.msra.mxu0 0.0
      %1074 = vmatpush.msra.mxu0 0.0
      %1075 = vmatpush.msra.mxu0 %v1038
      %1076 = vmatmul.f32.gmra.mxu0 %v1034
      %v1077 = vpop.f32.mrf.mxu0
      %v1078 = vadd.f32 0.0, %v1077
      %1079 = vdwg.mxu0
      %v1080 = vadd.f32 %v1009, %v1058
      %v1081 = vadd.f32 %v1010, %v1078
      %v1082 = vld [vmem:[%s4] sm:$0xf]
      %v1083 = vld [vmem:[#allocation2] sm:$0xff]
      %v1084 = vld [vmem:[#allocation2 + $0x8] sm:$0xf]
      %1087 = vst [vmem:[#allocation1] ss:$2 sm:$0xff] %v1083
      %s1088 = scalar_lea.vmem [#allocation1], 16
      %1089 = vst [vmem:[%s1088] ss:$2 sm:$0xff] %v1084
      %v1090 = vld.sshfl [vmem:[#allocation1] sm:$0xff pattern:$0x75316420]
      %v1091 = vld.sshfl [vmem:[#allocation1 + $0x8] sm:$0xff pattern:$0x75316420]
      %v1092 = vld.sshfl [vmem:[#allocation1 + $0x10] sm:$0xff pattern:$0x75316420]
      %1093 = vrot.lane.b32.xlu0 %v1090, 87
      %v1094 = vpop.permute.xlu0 %1093
      %1095 = vrot.lane.b32.xlu0 %v1091, 87
      %v1096 = vpop.permute.xlu0 %1095
      %1097 = vrot.lane.b32.xlu0 %v1092, 87
      %v1098 = vpop.permute.xlu0 %1097
      %vm1099 = vcmask 711680
      %v1100 = vsel %vm1099, %v1094, %v1096
      %v1101 = vsel %vm1099, %v1096, %v1098
      %v1104 = vsel %vm633, %v1100, 0.0
      %v1105 = vsel %vm634, %v1101, 0.0
      %1107 = vrot.lane.b32.xlu0 %v1082, 96
      %v1108 = vpop.permute.xlu0 %1107
      %v1109 = vsel %vm311, %v1108, 0
      %v1112 = vsel %vm315, %v1104, 0
      %v1115 = vsel %vm315, %v1105, 0
      %1117 = vmatpush.msra.mxu0 0.0
      %1118 = vmatpush.msra.mxu0 0.0
      %1119 = vmatpush.msra.mxu0 0.0
      %1120 = vmatpush.msra.mxu0 0.0
      %1121 = vmatpush.msra.mxu0 0.0
      %1122 = vmatpush.msra.mxu0 0.0
      %1123 = vmatpush.msra.mxu0 0.0
      %1124 = vmatpush.msra.mxu0 0.0
      %1125 = vmatpush.msra.mxu0 0.0
      %1126 = vmatpush.msra.mxu0 0.0
      %1127 = vmatpush.msra.mxu0 0.0
      %1128 = vmatpush.msra.mxu0 0.0
      %1129 = vmatpush.msra.mxu0 0.0
      %1130 = vmatpush.msra.mxu0 0.0
      %1131 = vmatpush.msra.mxu0 0.0
      %1132 = vmatpush.msra.mxu0 %v1112
      %1133 = vmatmul.f32.gmra.mxu0 %v1109
      %v1134 = vpop.f32.mrf.mxu0
      %v1135 = vadd.f32 0.0, %v1134
      %1136 = vdwg.mxu0
      %1137 = vmatpush.msra.mxu0 0.0
      %1138 = vmatpush.msra.mxu0 0.0
      %1139 = vmatpush.msra.mxu0 0.0
      %1140 = vmatpush.msra.mxu0 0.0
      %1141 = vmatpush.msra.mxu0 0.0
      %1142 = vmatpush.msra.mxu0 0.0
      %1143 = vmatpush.msra.mxu0 0.0
      %1144 = vmatpush.msra.mxu0 0.0
      %1145 = vmatpush.msra.mxu0 0.0
      %1146 = vmatpush.msra.mxu0 0.0
      %1147 = vmatpush.msra.mxu0 0.0
      %1148 = vmatpush.msra.mxu0 0.0
      %1149 = vmatpush.msra.mxu0 0.0
      %1150 = vmatpush.msra.mxu0 0.0
      %1151 = vmatpush.msra.mxu0 0.0
      %1152 = vmatpush.msra.mxu0 %v1115
      %1153 = vmatmul.f32.gmra.mxu0 %v1109
      %v1154 = vpop.f32.mrf.mxu0
      %v1155 = vadd.f32 0.0, %v1154
      %1156 = vdwg.mxu0
      %v1157 = vadd.f32 %v1080, %v1135
      %v1158 = vadd.f32 %v1081, %v1155
      %1160 = vset.pattern.permute.xlu0 0
      %1161 = vperm.xlu0 %1160, %v297
      %v1162 = vpop.permute.xlu0 %1161
      %v1164 = vadd.f32 %v1157, %v1162
      %v1165 = vadd.f32 %v1158, %v1162
      %vm1166 = vcmp.gt.f32.partialorder %v1164, 0.0
      %vm1167 = vcmp.gt.f32.partialorder %v1165, 0.0
      %1168 = vset.pattern.permute.xlu0 1
      %1169 = vperm.xlu0 %1168, %v297
      %v1170 = vpop.permute.xlu0 %1169
      %v1172 = vmul.f32 %v1170, %v1164
      %v1173 = vmul.f32 %v1170, %v1165
      %v1174 = vsel %vm1166, %v1164, %v1172
      %v1175 = vsel %vm1167, %v1165, %v1173
      %1176 = vst [vmem:[#allocation3] sm:$0xff] 0.0
      %1177 = vst [vmem:[#allocation3 + $0x8] sm:$0xff] 0.0
      %vm1178 = vcmask 392192
      %1179 = vst.msk [vmem:[#allocation3 + $0x10] sm:$0xff] %vm1178, 0.0
      %1182 = vrot.lane.b32.xlu0 %v1174, 24
      %v1183 = vpop.permute.xlu0 %1182
      %1184 = vrot.lane.b32.xlu0 %v1175, 24
      %v1185 = vpop.permute.xlu0 %1184
      %v1186 = vsel %vm472, %v1183, %v1185
      %1190 = vst.msk [vmem:[#allocation3] sm:$0xf] %vm476, %v1183
      %1191 = vst [vmem:[#allocation3 + $0x8] sm:$0xf] %v1186
      %1192 = vst.msk [vmem:[#allocation3 + $0x10] sm:$0xf] %vm480, %v1185
      %v1195 = vrot.slane %v368, 4
      %v1196 = vrot.slane %v369, 4
      %1197 = vrot.lane.b32.xlu0 %v1195, 24
      %v1198 = vpop.permute.xlu0 %1197
      %1199 = vrot.lane.b32.xlu0 %v1196, 24
      %v1200 = vpop.permute.xlu0 %1199
      %v1201 = vsel %vm472, %v1198, %v1200
      %vm1205 = vcmask 1047748
      %1206 = vst.msk [vmem:[#allocation3] sm:$0xf0] %vm1205, %v1198
      %1207 = vst [vmem:[#allocation3 + $0x8] sm:$0xf0] %v1201
      %vm1208 = vcmask 195588
      %1209 = vst.msk [vmem:[#allocation3 + $0x10] sm:$0xf0] %vm1208, %v1200
      %v1210 = vld [vmem:[%s5] sm:$0xff]
      %v1211 = vld [vmem:[%s5 + $0x8] sm:$0xff]
      %v1212 = vld [vmem:[#allocation3] sm:$0xff]
      %v1213 = vld [vmem:[#allocation3 + $0x8] sm:$0xff]
      %v1214 = vld [vmem:[#allocation3 + $0x10] sm:$0xff]
      %1218 = vrot.lane.b32.xlu0 %v1212, 121
      %v1219 = vpop.permute.xlu0 %1218
      %1220 = vrot.lane.b32.xlu0 %v1213, 121
      %v1221 = vpop.permute.xlu0 %1220
      %1222 = vrot.lane.b32.xlu0 %v1214, 121
      %v1223 = vpop.permute.xlu0 %1222
      %v1224 = vsel %vm503, %v1219, %v1221
      %v1225 = vsel %vm503, %v1221, %v1223
      %v1228 = vsel %vm487, %v1224, 0.0
      %v1229 = vsel %vm488, %v1225, 0.0
      %1232 = vrot.lane.b32.xlu0 %v1210, 120
      %v1233 = vpop.permute.xlu0 %1232
      %1234 = vrot.lane.b32.xlu0 %v1211, 120
      %v1235 = vpop.permute.xlu0 %1234
      %1236 = vrot.lane.b32.xlu0 %v1212, 120
      %v1237 = vpop.permute.xlu0 %1236
      %1238 = vrot.lane.b32.xlu0 %v1213, 120
      %v1239 = vpop.permute.xlu0 %1238
      %1240 = vrot.lane.b32.xlu0 %v1214, 120
      %v1241 = vpop.permute.xlu0 %1240
      %v1242 = vsel %vm530, %v1237, %v1239
      %v1243 = vsel %vm530, %v1239, %v1241
      %vm1246 = vcmask 64512
      %v1247 = vsel %vm1246, %v1233, 0
      %v1249 = vsel %vm1246, %v1235, 0
      %1251 = vmatpush.msra.mxu0 0.0
      %1252 = vmatpush.msra.mxu0 0.0
      %1253 = vmatpush.msra.mxu0 0.0
      %1254 = vmatpush.msra.mxu0 0.0
      %1255 = vmatpush.msra.mxu0 0.0
      %1256 = vmatpush.msra.mxu0 0.0
      %1257 = vmatpush.msra.mxu0 0.0
      %1258 = vmatpush.msra.mxu0 0.0
      %1259 = vmatpush.msra.mxu0 0.0
      %1260 = vmatpush.msra.mxu0 0.0
      %1261 = vmatpush.msra.mxu0 0.0
      %1262 = vmatpush.msra.mxu0 0.0
      %1263 = vmatpush.msra.mxu0 0.0
      %1264 = vmatpush.msra.mxu0 0.0
      %1265 = vmatpush.msra.mxu0 0.0
      %1266 = vmatpush.msra.mxu0 %v1242
      %1267 = vmatmul.f32.gmra.mxu0 %v1247
      %v1268 = vpop.f32.mrf.mxu0
      %v1269 = vadd.f32 0.0, %v1268
      %1270 = vmatmul.f32.gmra.mxu0 %v1249
      %v1271 = vpop.f32.mrf.mxu0
      %v1272 = vadd.f32 0.0, %v1271
      %1273 = vdwg.mxu0
      %1274 = vmatpush.msra.mxu0 0.0
      %1275 = vmatpush.msra.mxu0 0.0
      %1276 = vmatpush.msra.mxu0 0.0
      %1277 = vmatpush.msra.mxu0 0.0
      %1278 = vmatpush.msra.mxu0 0.0
      %1279 = vmatpush.msra.mxu0 0.0
      %1280 = vmatpush.msra.mxu0 0.0
      %1281 = vmatpush.msra.mxu0 0.0
      %1282 = vmatpush.msra.mxu0 0.0
      %1283 = vmatpush.msra.mxu0 0.0
      %1284 = vmatpush.msra.mxu0 0.0
      %1285 = vmatpush.msra.mxu0 0.0
      %1286 = vmatpush.msra.mxu0 0.0
      %1287 = vmatpush.msra.mxu0 0.0
      %1288 = vmatpush.msra.mxu0 0.0
      %1289 = vmatpush.msra.mxu0 %v1243
      %1290 = vmatmul.f32.gmra.mxu0 %v1247
      %v1291 = vpop.f32.mrf.mxu0
      %v1292 = vadd.f32 0.0, %v1291
      %1293 = vmatmul.f32.gmra.mxu0 %v1249
      %v1294 = vpop.f32.mrf.mxu0
      %v1295 = vadd.f32 0.0, %v1294
      %1296 = vdwg.mxu0
      %v1297 = vsel %vm1246, %v1210, 0
      %v1299 = vsel %vm1246, %v1211, 0
      %1301 = vmatpush.msra.mxu0 0.0
      %1302 = vmatpush.msra.mxu0 0.0
      %1303 = vmatpush.msra.mxu0 0.0
      %1304 = vmatpush.msra.mxu0 0.0
      %1305 = vmatpush.msra.mxu0 0.0
      %1306 = vmatpush.msra.mxu0 0.0
      %1307 = vmatpush.msra.mxu0 0.0
      %1308 = vmatpush.msra.mxu0 0.0
      %1309 = vmatpush.msra.mxu0 0.0
      %1310 = vmatpush.msra.mxu0 0.0
      %1311 = vmatpush.msra.mxu0 0.0
      %1312 = vmatpush.msra.mxu0 0.0
      %1313 = vmatpush.msra.mxu0 0.0
      %1314 = vmatpush.msra.mxu0 0.0
      %1315 = vmatpush.msra.mxu0 0.0
      %1316 = vmatpush.msra.mxu0 %v1228
      %1317 = vmatmul.f32.gmra.mxu0 %v1297
      %v1318 = vpop.f32.mrf.mxu0
      %v1319 = vadd.f32 %v1269, %v1318
      %1320 = vmatmul.f32.gmra.mxu0 %v1299
      %v1321 = vpop.f32.mrf.mxu0
      %v1322 = vadd.f32 %v1272, %v1321
      %1323 = vdwg.mxu0
      %1324 = vmatpush.msra.mxu0 0.0
      %1325 = vmatpush.msra.mxu0 0.0
      %1326 = vmatpush.msra.mxu0 0.0
      %1327 = vmatpush.msra.mxu0 0.0
      %1328 = vmatpush.msra.mxu0 0.0
      %1329 = vmatpush.msra.mxu0 0.0
      %1330 = vmatpush.msra.mxu0 0.0
      %1331 = vmatpush.msra.mxu0 0.0
      %1332 = vmatpush.msra.mxu0 0.0
      %1333 = vmatpush.msra.mxu0 0.0
      %1334 = vmatpush.msra.mxu0 0.0
      %1335 = vmatpush.msra.mxu0 0.0
      %1336 = vmatpush.msra.mxu0 0.0
      %1337 = vmatpush.msra.mxu0 0.0
      %1338 = vmatpush.msra.mxu0 0.0
      %1339 = vmatpush.msra.mxu0 %v1229
      %1340 = vmatmul.f32.gmra.mxu0 %v1297
      %v1341 = vpop.f32.mrf.mxu0
      %v1342 = vadd.f32 %v1292, %v1341
      %1343 = vmatmul.f32.gmra.mxu0 %v1299
      %v1344 = vpop.f32.mrf.mxu0
      %v1345 = vadd.f32 %v1295, %v1344
      %1346 = vdwg.mxu0
      %1347 = vrot.lane.b32.xlu0 %v1212, 119
      %v1348 = vpop.permute.xlu0 %1347
      %1349 = vrot.lane.b32.xlu0 %v1213, 119
      %v1350 = vpop.permute.xlu0 %1349
      %1351 = vrot.lane.b32.xlu0 %v1214, 119
      %v1352 = vpop.permute.xlu0 %1351
      %v1353 = vsel %vm649, %v1348, %v1350
      %v1354 = vsel %vm649, %v1350, %v1352
      %v1357 = vsel %vm633, %v1353, 0.0
      %v1358 = vsel %vm634, %v1354, 0.0
      %1359 = vrot.lane.b32.xlu0 %v1210, 112
      %v1360 = vpop.permute.xlu0 %1359
      %1361 = vrot.lane.b32.xlu0 %v1211, 112
      %v1362 = vpop.permute.xlu0 %1361
      %v1363 = vsel %vm1246, %v1360, 0
      %v1365 = vsel %vm1246, %v1362, 0
      %1367 = vmatpush.msra.mxu0 0.0
      %1368 = vmatpush.msra.mxu0 0.0
      %1369 = vmatpush.msra.mxu0 0.0
      %1370 = vmatpush.msra.mxu0 0.0
      %1371 = vmatpush.msra.mxu0 0.0
      %1372 = vmatpush.msra.mxu0 0.0
      %1373 = vmatpush.msra.mxu0 0.0
      %1374 = vmatpush.msra.mxu0 0.0
      %1375 = vmatpush.msra.mxu0 0.0
      %1376 = vmatpush.msra.mxu0 0.0
      %1377 = vmatpush.msra.mxu0 0.0
      %1378 = vmatpush.msra.mxu0 0.0
      %1379 = vmatpush.msra.mxu0 0.0
      %1380 = vmatpush.msra.mxu0 0.0
      %1381 = vmatpush.msra.mxu0 0.0
      %1382 = vmatpush.msra.mxu0 %v1357
      %1383 = vmatmul.f32.gmra.mxu0 %v1363
      %v1384 = vpop.f32.mrf.mxu0
      %v1385 = vadd.f32 0.0, %v1384
      %1386 = vmatmul.f32.gmra.mxu0 %v1365
      %v1387 = vpop.f32.mrf.mxu0
      %v1388 = vadd.f32 0.0, %v1387
      %1389 = vdwg.mxu0
      %1390 = vmatpush.msra.mxu0 0.0
      %1391 = vmatpush.msra.mxu0 0.0
      %1392 = vmatpush.msra.mxu0 0.0
      %1393 = vmatpush.msra.mxu0 0.0
      %1394 = vmatpush.msra.mxu0 0.0
      %1395 = vmatpush.msra.mxu0 0.0
      %1396 = vmatpush.msra.mxu0 0.0
      %1397 = vmatpush.msra.mxu0 0.0
      %1398 = vmatpush.msra.mxu0 0.0
      %1399 = vmatpush.msra.mxu0 0.0
      %1400 = vmatpush.msra.mxu0 0.0
      %1401 = vmatpush.msra.mxu0 0.0
      %1402 = vmatpush.msra.mxu0 0.0
      %1403 = vmatpush.msra.mxu0 0.0
      %1404 = vmatpush.msra.mxu0 0.0
      %1405 = vmatpush.msra.mxu0 %v1358
      %1406 = vmatmul.f32.gmra.mxu0 %v1363
      %v1407 = vpop.f32.mrf.mxu0
      %v1408 = vadd.f32 0.0, %v1407
      %1409 = vmatmul.f32.gmra.mxu0 %v1365
      %v1410 = vpop.f32.mrf.mxu0
      %v1411 = vadd.f32 0.0, %v1410
      %1412 = vdwg.mxu0
      %v1413 = vadd.f32 %v1319, %v1385
      %v1414 = vadd.f32 %v1342, %v1408
      %v1415 = vadd.f32 %v1322, %v1388
      %v1416 = vadd.f32 %v1345, %v1411
      %1417 = vrot.lane.b32.xlu0 %v1212, 105
      %v1418 = vpop.permute.xlu0 %1417
      %1419 = vrot.lane.b32.xlu0 %v1213, 105
      %v1420 = vpop.permute.xlu0 %1419
      %1421 = vrot.lane.b32.xlu0 %v1214, 105
      %v1422 = vpop.permute.xlu0 %1421
      %v1423 = vsel %vm726, %v1418, %v1420
      %v1424 = vsel %vm726, %v1420, %v1422
      %v1427 = vsel %vm487, %v1423, 0.0
      %v1428 = vsel %vm488, %v1424, 0.0
      %1429 = vrot.lane.b32.xlu0 %v1210, 104
      %v1430 = vpop.permute.xlu0 %1429
      %1431 = vrot.lane.b32.xlu0 %v1211, 104
      %v1432 = vpop.permute.xlu0 %1431
      %v1433 = vsel %vm1246, %v1430, 0
      %v1435 = vsel %vm1246, %v1432, 0
      %1437 = vmatpush.msra.mxu0 0.0
      %1438 = vmatpush.msra.mxu0 0.0
      %1439 = vmatpush.msra.mxu0 0.0
      %1440 = vmatpush.msra.mxu0 0.0
      %1441 = vmatpush.msra.mxu0 0.0
      %1442 = vmatpush.msra.mxu0 0.0
      %1443 = vmatpush.msra.mxu0 0.0
      %1444 = vmatpush.msra.mxu0 0.0
      %1445 = vmatpush.msra.mxu0 0.0
      %1446 = vmatpush.msra.mxu0 0.0
      %1447 = vmatpush.msra.mxu0 0.0
      %1448 = vmatpush.msra.mxu0 0.0
      %1449 = vmatpush.msra.mxu0 0.0
      %1450 = vmatpush.msra.mxu0 0.0
      %1451 = vmatpush.msra.mxu0 0.0
      %1452 = vmatpush.msra.mxu0 %v1427
      %1453 = vmatmul.f32.gmra.mxu0 %v1433
      %v1454 = vpop.f32.mrf.mxu0
      %v1455 = vadd.f32 0.0, %v1454
      %1456 = vmatmul.f32.gmra.mxu0 %v1435
      %v1457 = vpop.f32.mrf.mxu0
      %v1458 = vadd.f32 0.0, %v1457
      %1459 = vdwg.mxu0
      %1460 = vmatpush.msra.mxu0 0.0
      %1461 = vmatpush.msra.mxu0 0.0
      %1462 = vmatpush.msra.mxu0 0.0
      %1463 = vmatpush.msra.mxu0 0.0
      %1464 = vmatpush.msra.mxu0 0.0
      %1465 = vmatpush.msra.mxu0 0.0
      %1466 = vmatpush.msra.mxu0 0.0
      %1467 = vmatpush.msra.mxu0 0.0
      %1468 = vmatpush.msra.mxu0 0.0
      %1469 = vmatpush.msra.mxu0 0.0
      %1470 = vmatpush.msra.mxu0 0.0
      %1471 = vmatpush.msra.mxu0 0.0
      %1472 = vmatpush.msra.mxu0 0.0
      %1473 = vmatpush.msra.mxu0 0.0
      %1474 = vmatpush.msra.mxu0 0.0
      %1475 = vmatpush.msra.mxu0 %v1428
      %1476 = vmatmul.f32.gmra.mxu0 %v1433
      %v1477 = vpop.f32.mrf.mxu0
      %v1478 = vadd.f32 0.0, %v1477
      %1479 = vmatmul.f32.gmra.mxu0 %v1435
      %v1480 = vpop.f32.mrf.mxu0
      %v1481 = vadd.f32 0.0, %v1480
      %1482 = vdwg.mxu0
      %v1483 = vadd.f32 %v1413, %v1455
      %v1484 = vadd.f32 %v1414, %v1478
      %v1485 = vadd.f32 %v1415, %v1458
      %v1486 = vadd.f32 %v1416, %v1481
      %1487 = vrot.lane.b32.xlu0 %v1210, 96
      %v1488 = vpop.permute.xlu0 %1487
      %1489 = vrot.lane.b32.xlu0 %v1211, 96
      %v1490 = vpop.permute.xlu0 %1489
      %1491 = vrot.lane.b32.xlu0 %v1212, 104
      %v1492 = vpop.permute.xlu0 %1491
      %1493 = vrot.lane.b32.xlu0 %v1213, 104
      %v1494 = vpop.permute.xlu0 %1493
      %1495 = vrot.lane.b32.xlu0 %v1214, 104
      %v1496 = vpop.permute.xlu0 %1495
      %v1497 = vsel %vm806, %v1492, %v1494
      %v1498 = vsel %vm806, %v1494, %v1496
      %v1501 = vsel %vm1246, %v1488, 0
      %v1503 = vsel %vm1246, %v1490, 0
      %1505 = vmatpush.msra.mxu0 0.0
      %1506 = vmatpush.msra.mxu0 0.0
      %1507 = vmatpush.msra.mxu0 0.0
      %1508 = vmatpush.msra.mxu0 0.0
      %1509 = vmatpush.msra.mxu0 0.0
      %1510 = vmatpush.msra.mxu0 0.0
      %1511 = vmatpush.msra.mxu0 0.0
      %1512 = vmatpush.msra.mxu0 0.0
      %1513 = vmatpush.msra.mxu0 0.0
      %1514 = vmatpush.msra.mxu0 0.0
      %1515 = vmatpush.msra.mxu0 0.0
      %1516 = vmatpush.msra.mxu0 0.0
      %1517 = vmatpush.msra.mxu0 0.0
      %1518 = vmatpush.msra.mxu0 0.0
      %1519 = vmatpush.msra.mxu0 0.0
      %1520 = vmatpush.msra.mxu0 %v1497
      %1521 = vmatmul.f32.gmra.mxu0 %v1501
      %v1522 = vpop.f32.mrf.mxu0
      %v1523 = vadd.f32 0.0, %v1522
      %1524 = vmatmul.f32.gmra.mxu0 %v1503
      %v1525 = vpop.f32.mrf.mxu0
      %v1526 = vadd.f32 0.0, %v1525
      %1527 = vdwg.mxu0
      %1528 = vmatpush.msra.mxu0 0.0
      %1529 = vmatpush.msra.mxu0 0.0
      %1530 = vmatpush.msra.mxu0 0.0
      %1531 = vmatpush.msra.mxu0 0.0
      %1532 = vmatpush.msra.mxu0 0.0
      %1533 = vmatpush.msra.mxu0 0.0
      %1534 = vmatpush.msra.mxu0 0.0
      %1535 = vmatpush.msra.mxu0 0.0
      %1536 = vmatpush.msra.mxu0 0.0
      %1537 = vmatpush.msra.mxu0 0.0
      %1538 = vmatpush.msra.mxu0 0.0
      %1539 = vmatpush.msra.mxu0 0.0
      %1540 = vmatpush.msra.mxu0 0.0
      %1541 = vmatpush.msra.mxu0 0.0
      %1542 = vmatpush.msra.mxu0 0.0
      %1543 = vmatpush.msra.mxu0 %v1498
      %1544 = vmatmul.f32.gmra.mxu0 %v1501
      %v1545 = vpop.f32.mrf.mxu0
      %v1546 = vadd.f32 0.0, %v1545
      %1547 = vmatmul.f32.gmra.mxu0 %v1503
      %v1548 = vpop.f32.mrf.mxu0
      %v1549 = vadd.f32 0.0, %v1548
      %1550 = vdwg.mxu0
      %v1551 = vadd.f32 %v1483, %v1523
      %v1552 = vadd.f32 %v1484, %v1546
      %v1553 = vadd.f32 %v1485, %v1526
      %v1554 = vadd.f32 %v1486, %v1549
      %1555 = vrot.lane.b32.xlu0 %v1212, 103
      %v1556 = vpop.permute.xlu0 %1555
      %1557 = vrot.lane.b32.xlu0 %v1213, 103
      %v1558 = vpop.permute.xlu0 %1557
      %1559 = vrot.lane.b32.xlu0 %v1214, 103
      %v1560 = vpop.permute.xlu0 %1559
      %v1561 = vsel %vm874, %v1556, %v1558
      %v1562 = vsel %vm874, %v1558, %v1560
      %v1565 = vsel %vm633, %v1561, 0.0
      %v1566 = vsel %vm634, %v1562, 0.0
      %1567 = vrot.lane.b32.xlu0 %v1210, 88
      %v1568 = vpop.permute.xlu0 %1567
      %1569 = vrot.lane.b32.xlu0 %v1211, 88
      %v1570 = vpop.permute.xlu0 %1569
      %v1571 = vsel %vm1246, %v1568, 0
      %v1573 = vsel %vm1246, %v1570, 0
      %1575 = vmatpush.msra.mxu0 0.0
      %1576 = vmatpush.msra.mxu0 0.0
      %1577 = vmatpush.msra.mxu0 0.0
      %1578 = vmatpush.msra.mxu0 0.0
      %1579 = vmatpush.msra.mxu0 0.0
      %1580 = vmatpush.msra.mxu0 0.0
      %1581 = vmatpush.msra.mxu0 0.0
      %1582 = vmatpush.msra.mxu0 0.0
      %1583 = vmatpush.msra.mxu0 0.0
      %1584 = vmatpush.msra.mxu0 0.0
      %1585 = vmatpush.msra.mxu0 0.0
      %1586 = vmatpush.msra.mxu0 0.0
      %1587 = vmatpush.msra.mxu0 0.0
      %1588 = vmatpush.msra.mxu0 0.0
      %1589 = vmatpush.msra.mxu0 0.0
      %1590 = vmatpush.msra.mxu0 %v1565
      %1591 = vmatmul.f32.gmra.mxu0 %v1571
      %v1592 = vpop.f32.mrf.mxu0
      %v1593 = vadd.f32 0.0, %v1592
      %1594 = vmatmul.f32.gmra.mxu0 %v1573
      %v1595 = vpop.f32.mrf.mxu0
      %v1596 = vadd.f32 0.0, %v1595
      %1597 = vdwg.mxu0
      %1598 = vmatpush.msra.mxu0 0.0
      %1599 = vmatpush.msra.mxu0 0.0
      %1600 = vmatpush.msra.mxu0 0.0
      %1601 = vmatpush.msra.mxu0 0.0
      %1602 = vmatpush.msra.mxu0 0.0
      %1603 = vmatpush.msra.mxu0 0.0
      %1604 = vmatpush.msra.mxu0 0.0
      %1605 = vmatpush.msra.mxu0 0.0
      %1606 = vmatpush.msra.mxu0 0.0
      %1607 = vmatpush.msra.mxu0 0.0
      %1608 = vmatpush.msra.mxu0 0.0
      %1609 = vmatpush.msra.mxu0 0.0
      %1610 = vmatpush.msra.mxu0 0.0
      %1611 = vmatpush.msra.mxu0 0.0
      %1612 = vmatpush.msra.mxu0 0.0
      %1613 = vmatpush.msra.mxu0 %v1566
      %1614 = vmatmul.f32.gmra.mxu0 %v1571
      %v1615 = vpop.f32.mrf.mxu0
      %v1616 = vadd.f32 0.0, %v1615
      %1617 = vmatmul.f32.gmra.mxu0 %v1573
      %v1618 = vpop.f32.mrf.mxu0
      %v1619 = vadd.f32 0.0, %v1618
      %1620 = vdwg.mxu0
      %v1621 = vadd.f32 %v1551, %v1593
      %v1622 = vadd.f32 %v1552, %v1616
      %v1623 = vadd.f32 %v1553, %v1596
      %v1624 = vadd.f32 %v1554, %v1619
      %1625 = vrot.lane.b32.xlu0 %v1212, 89
      %v1626 = vpop.permute.xlu0 %1625
      %1627 = vrot.lane.b32.xlu0 %v1213, 89
      %v1628 = vpop.permute.xlu0 %1627
      %1629 = vrot.lane.b32.xlu0 %v1214, 89
      %v1630 = vpop.permute.xlu0 %1629
      %v1631 = vsel %vm951, %v1626, %v1628
      %v1632 = vsel %vm951, %v1628, %v1630
      %v1635 = vsel %vm487, %v1631, 0.0
      %v1636 = vsel %vm488, %v1632, 0.0
      %1637 = vrot.lane.b32.xlu0 %v1210, 80
      %v1638 = vpop.permute.xlu0 %1637
      %1639 = vrot.lane.b32.xlu0 %v1211, 80
      %v1640 = vpop.permute.xlu0 %1639
      %v1641 = vsel %vm1246, %v1638, 0
      %v1643 = vsel %vm1246, %v1640, 0
      %1645 = vmatpush.msra.mxu0 0.0
      %1646 = vmatpush.msra.mxu0 0.0
      %1647 = vmatpush.msra.mxu0 0.0
      %1648 = vmatpush.msra.mxu0 0.0
      %1649 = vmatpush.msra.mxu0 0.0
      %1650 = vmatpush.msra.mxu0 0.0
      %1651 = vmatpush.msra.mxu0 0.0
      %1652 = vmatpush.msra.mxu0 0.0
      %1653 = vmatpush.msra.mxu0 0.0
      %1654 = vmatpush.msra.mxu0 0.0
      %1655 = vmatpush.msra.mxu0 0.0
      %1656 = vmatpush.msra.mxu0 0.0
      %1657 = vmatpush.msra.mxu0 0.0
      %1658 = vmatpush.msra.mxu0 0.0
      %1659 = vmatpush.msra.mxu0 0.0
      %1660 = vmatpush.msra.mxu0 %v1635
      %1661 = vmatmul.f32.gmra.mxu0 %v1641
      %v1662 = vpop.f32.mrf.mxu0
      %v1663 = vadd.f32 0.0, %v1662
      %1664 = vmatmul.f32.gmra.mxu0 %v1643
      %v1665 = vpop.f32.mrf.mxu0
      %v1666 = vadd.f32 0.0, %v1665
      %1667 = vdwg.mxu0
      %1668 = vmatpush.msra.mxu0 0.0
      %1669 = vmatpush.msra.mxu0 0.0
      %1670 = vmatpush.msra.mxu0 0.0
      %1671 = vmatpush.msra.mxu0 0.0
      %1672 = vmatpush.msra.mxu0 0.0
      %1673 = vmatpush.msra.mxu0 0.0
      %1674 = vmatpush.msra.mxu0 0.0
      %1675 = vmatpush.msra.mxu0 0.0
      %1676 = vmatpush.msra.mxu0 0.0
      %1677 = vmatpush.msra.mxu0 0.0
      %1678 = vmatpush.msra.mxu0 0.0
      %1679 = vmatpush.msra.mxu0 0.0
      %1680 = vmatpush.msra.mxu0 0.0
      %1681 = vmatpush.msra.mxu0 0.0
      %1682 = vmatpush.msra.mxu0 0.0
      %1683 = vmatpush.msra.mxu0 %v1636
      %1684 = vmatmul.f32.gmra.mxu0 %v1641
      %v1685 = vpop.f32.mrf.mxu0
      %v1686 = vadd.f32 0.0, %v1685
      %1687 = vmatmul.f32.gmra.mxu0 %v1643
      %v1688 = vpop.f32.mrf.mxu0
      %v1689 = vadd.f32 0.0, %v1688
      %1690 = vdwg.mxu0
      %v1691 = vadd.f32 %v1621, %v1663
      %v1692 = vadd.f32 %v1622, %v1686
      %v1693 = vadd.f32 %v1623, %v1666
      %v1694 = vadd.f32 %v1624, %v1689
      %1695 = vrot.lane.b32.xlu0 %v1210, 72
      %v1696 = vpop.permute.xlu0 %1695
      %1697 = vrot.lane.b32.xlu0 %v1211, 72
      %v1698 = vpop.permute.xlu0 %1697
      %1699 = vrot.lane.b32.xlu0 %v1212, 88
      %v1700 = vpop.permute.xlu0 %1699
      %1701 = vrot.lane.b32.xlu0 %v1213, 88
      %v1702 = vpop.permute.xlu0 %1701
      %1703 = vrot.lane.b32.xlu0 %v1214, 88
      %v1704 = vpop.permute.xlu0 %1703
      %v1705 = vsel %vm1031, %v1700, %v1702
      %v1706 = vsel %vm1031, %v1702, %v1704
      %v1709 = vsel %vm1246, %v1696, 0
      %v1711 = vsel %vm1246, %v1698, 0
      %1713 = vmatpush.msra.mxu0 0.0
      %1714 = vmatpush.msra.mxu0 0.0
      %1715 = vmatpush.msra.mxu0 0.0
      %1716 = vmatpush.msra.mxu0 0.0
      %1717 = vmatpush.msra.mxu0 0.0
      %1718 = vmatpush.msra.mxu0 0.0
      %1719 = vmatpush.msra.mxu0 0.0
      %1720 = vmatpush.msra.mxu0 0.0
      %1721 = vmatpush.msra.mxu0 0.0
      %1722 = vmatpush.msra.mxu0 0.0
      %1723 = vmatpush.msra.mxu0 0.0
      %1724 = vmatpush.msra.mxu0 0.0
      %1725 = vmatpush.msra.mxu0 0.0
      %1726 = vmatpush.msra.mxu0 0.0
      %1727 = vmatpush.msra.mxu0 0.0
      %1728 = vmatpush.msra.mxu0 %v1705
      %1729 = vmatmul.f32.gmra.mxu0 %v1709
      %v1730 = vpop.f32.mrf.mxu0
      %v1731 = vadd.f32 0.0, %v1730
      %1732 = vmatmul.f32.gmra.mxu0 %v1711
      %v1733 = vpop.f32.mrf.mxu0
      %v1734 = vadd.f32 0.0, %v1733
      %1735 = vdwg.mxu0
      %1736 = vmatpush.msra.mxu0 0.0
      %1737 = vmatpush.msra.mxu0 0.0
      %1738 = vmatpush.msra.mxu0 0.0
      %1739 = vmatpush.msra.mxu0 0.0
      %1740 = vmatpush.msra.mxu0 0.0
      %1741 = vmatpush.msra.mxu0 0.0
      %1742 = vmatpush.msra.mxu0 0.0
      %1743 = vmatpush.msra.mxu0 0.0
      %1744 = vmatpush.msra.mxu0 0.0
      %1745 = vmatpush.msra.mxu0 0.0
      %1746 = vmatpush.msra.mxu0 0.0
      %1747 = vmatpush.msra.mxu0 0.0
      %1748 = vmatpush.msra.mxu0 0.0
      %1749 = vmatpush.msra.mxu0 0.0
      %1750 = vmatpush.msra.mxu0 0.0
      %1751 = vmatpush.msra.mxu0 %v1706
      %1752 = vmatmul.f32.gmra.mxu0 %v1709
      %v1753 = vpop.f32.mrf.mxu0
      %v1754 = vadd.f32 0.0, %v1753
      %1755 = vmatmul.f32.gmra.mxu0 %v1711
      %v1756 = vpop.f32.mrf.mxu0
      %v1757 = vadd.f32 0.0, %v1756
      %1758 = vdwg.mxu0
      %v1759 = vadd.f32 %v1691, %v1731
      %v1760 = vadd.f32 %v1692, %v1754
      %v1761 = vadd.f32 %v1693, %v1734
      %v1762 = vadd.f32 %v1694, %v1757
      %1763 = vrot.lane.b32.xlu0 %v1212, 87
      %v1764 = vpop.permute.xlu0 %1763
      %1765 = vrot.lane.b32.xlu0 %v1213, 87
      %v1766 = vpop.permute.xlu0 %1765
      %1767 = vrot.lane.b32.xlu0 %v1214, 87
      %v1768 = vpop.permute.xlu0 %1767
      %v1769 = vsel %vm1099, %v1764, %v1766
      %v1770 = vsel %vm1099, %v1766, %v1768
      %v1773 = vsel %vm633, %v1769, 0.0
      %v1774 = vsel %vm634, %v1770, 0.0
      %1775 = vrot.lane.b32.xlu0 %v1210, 64
      %v1776 = vpop.permute.xlu0 %1775
      %1777 = vrot.lane.b32.xlu0 %v1211, 64
      %v1778 = vpop.permute.xlu0 %1777
      %v1779 = vsel %vm1246, %v1776, 0
      %v1781 = vsel %vm1246, %v1778, 0
      %1783 = vmatpush.msra.mxu0 0.0
      %1784 = vmatpush.msra.mxu0 0.0
      %1785 = vmatpush.msra.mxu0 0.0
      %1786 = vmatpush.msra.mxu0 0.0
      %1787 = vmatpush.msra.mxu0 0.0
      %1788 = vmatpush.msra.mxu0 0.0
      %1789 = vmatpush.msra.mxu0 0.0
      %1790 = vmatpush.msra.mxu0 0.0
      %1791 = vmatpush.msra.mxu0 0.0
      %1792 = vmatpush.msra.mxu0 0.0
      %1793 = vmatpush.msra.mxu0 0.0
      %1794 = vmatpush.msra.mxu0 0.0
      %1795 = vmatpush.msra.mxu0 0.0
      %1796 = vmatpush.msra.mxu0 0.0
      %1797 = vmatpush.msra.mxu0 0.0
      %1798 = vmatpush.msra.mxu0 %v1773
      %1799 = vmatmul.f32.gmra.mxu0 %v1779
      %v1800 = vpop.f32.mrf.mxu0
      %v1801 = vadd.f32 0.0, %v1800
      %1802 = vmatmul.f32.gmra.mxu0 %v1781
      %v1803 = vpop.f32.mrf.mxu0
      %v1804 = vadd.f32 0.0, %v1803
      %1805 = vdwg.mxu0
      %1806 = vmatpush.msra.mxu0 0.0
      %1807 = vmatpush.msra.mxu0 0.0
      %1808 = vmatpush.msra.mxu0 0.0
      %1809 = vmatpush.msra.mxu0 0.0
      %1810 = vmatpush.msra.mxu0 0.0
      %1811 = vmatpush.msra.mxu0 0.0
      %1812 = vmatpush.msra.mxu0 0.0
      %1813 = vmatpush.msra.mxu0 0.0
      %1814 = vmatpush.msra.mxu0 0.0
      %1815 = vmatpush.msra.mxu0 0.0
      %1816 = vmatpush.msra.mxu0 0.0
      %1817 = vmatpush.msra.mxu0 0.0
      %1818 = vmatpush.msra.mxu0 0.0
      %1819 = vmatpush.msra.mxu0 0.0
      %1820 = vmatpush.msra.mxu0 0.0
      %1821 = vmatpush.msra.mxu0 %v1774
      %1822 = vmatmul.f32.gmra.mxu0 %v1779
      %v1823 = vpop.f32.mrf.mxu0
      %v1824 = vadd.f32 0.0, %v1823
      %1825 = vmatmul.f32.gmra.mxu0 %v1781
      %v1826 = vpop.f32.mrf.mxu0
      %v1827 = vadd.f32 0.0, %v1826
      %1828 = vdwg.mxu0
      %v1829 = vadd.f32 %v1759, %v1801
      %v1830 = vadd.f32 %v1760, %v1824
      %v1831 = vadd.f32 %v1761, %v1804
      %v1832 = vadd.f32 %v1762, %v1827
      %1834 = vset.pattern.permute.xlu0 0
      %1835 = vperm.xlu0 %1834, %v298
      %v1836 = vpop.permute.xlu0 %1835
      %1839 = vset.pattern.permute.xlu0 0
      %1840 = vperm.xlu0 %1839, %v299
      %v1841 = vpop.permute.xlu0 %1840
      %v1843 = vadd.f32 %v1829, %v1836
      %v1844 = vadd.f32 %v1830, %v1836
      %v1845 = vadd.f32 %v1831, %v1841
      %v1846 = vadd.f32 %v1832, %v1841
      %vm1847 = vcmp.gt.f32.partialorder %v1843, 0.0
      %vm1848 = vcmp.gt.f32.partialorder %v1844, 0.0
      %vm1849 = vcmp.gt.f32.partialorder %v1845, 0.0
      %vm1850 = vcmp.gt.f32.partialorder %v1846, 0.0
      %1851 = vset.pattern.permute.xlu0 1
      %1852 = vperm.xlu0 %1851, %v298
      %v1853 = vpop.permute.xlu0 %1852
      %1855 = vset.pattern.permute.xlu0 1
      %1856 = vperm.xlu0 %1855, %v299
      %v1857 = vpop.permute.xlu0 %1856
      %v1859 = vmul.f32 %v1853, %v1843
      %v1860 = vmul.f32 %v1853, %v1844
      %v1861 = vmul.f32 %v1857, %v1845
      %v1862 = vmul.f32 %v1857, %v1846
      %v1863 = vsel %vm1847, %v1843, %v1859
      %v1864 = vsel %vm1848, %v1844, %v1860
      %v1865 = vsel %vm1849, %v1845, %v1861
      %v1866 = vsel %vm1850, %v1846, %v1862
      %1867 = vst [vmem:[%s295] sm:$0xff] %v1863
      %1868 = vst [vmem:[%s295 + $0x8] sm:$0xff] %v1864
      %1869 = vst [vmem:[%s295 + $0x10] sm:$0xff] %v1865
      %1870 = vst [vmem:[%s295 + $0x18] sm:$0xff] %v1866
      %p1871 = scmp.lt.s32.totalorder %s18, 1
      %s1872 = scalar_select %p1871, %s18, 1
      %s1873 = smul.addr %s1872, 4
      %s1874 = smul.addr %s1873, 8
      %s1875 = scalar_lea.vmem %s7, %s1874
      // Predicated region
      $region49: #{dsc_module_forward.1} parent=47 // pred_check
        %p1876 = pneg %p193
      $region50: #{dsc_module_forward.1} parent=47 // pred_check_branch
        %1878 = sbr.rel (%p1876) target = $region52
      $region51: #{dsc_module_forward.1} parent=47 // pred_region
        _
      $region52: #{dsc_module_forward.1} parent=47 // pred_fallthru
        _
    $region48: #{dsc_module_forward.1} parent=5 // pred_fallthru
      _
    %p1879 = scmp.le.s32.totalorder 2, %s13
    // Predicated region
    $region53: #{dsc_module_forward.1} parent=5 // pred_check
      %p1880 = pneg %p1879
    $region54: #{dsc_module_forward.1} parent=5 // pred_check_branch
      %1882 = sbr.rel (%p1880) target = $region56
    $region55: #{dsc_module_forward.1} parent=5 // pred_region
      %s1883 = ssub.s32 %s13, 2
      // Predicated region
      $region57: #{dsc_module_forward.1} parent=55 // pred_check
        %p1884 = pneg %p199
      $region58: #{dsc_module_forward.1} parent=55 // pred_check_branch
        %1886 = sbr.rel (%p1884) target = $region60
      $region59: #{dsc_module_forward.1} parent=55 // pred_region
        %p1887 = scmp.lt.s32.totalorder %s19, 1
        %s1888 = scalar_select %p1887, %s19, 1
        %s1889 = smul.addr %s1888, 4
        %s1890 = smul.addr %s1889, 8
        %s1891 = scalar_lea.vmem %s7, %s1890
      $region60: #{dsc_module_forward.1} parent=55 // pred_fallthru
        _
    $region56: #{dsc_module_forward.1} parent=5 // pred_fallthru
      _
  $region6: #{dsc_module_forward.1} parent=0 // loop_footer
    %s17 = sadd.s32 1, %s13
  $region7: #{dsc_module_forward.1} parent=0 // loop_footer_branch
    %12 = sbr.rel target = $region3
  $region8: #{dsc_module_forward.1} parent=0 // loop_exit
    _

</llo_original>
